<compile_context>
chip_gen: v5e
topology: v5e:2x2
jax: 0.10.0
libtpu: 0.0.40
codegen_flags: <defaults>
</compile_context>

<pallas_src>
import jax
import jax.numpy as jnp
from jax.experimental import pallas as pl
from jax.experimental.pallas import tpu as pltpu


def seghead_kernel(x_ref, w3_ref, bias_ref, w1_ref, out_ref, im2col_ref):
    # x_ref     : (1, 1, tH+2, W+2, Cin)  padded row slab (1-px halo), compute dtype
    # w3_ref    : (9*Cin, Mid)            3x3 weights, tap-major, BN scale folded in
    # bias_ref  : (1, Mid)                folded BN bias (f32)
    # w1_ref    : (Ncls, Mid)             1x1 conv weights
    # out_ref   : (1, Ncls, tH*W)         lane-dense output (spatial on lanes)
    # im2col_ref: (tH*W, 9*Cin)           VMEM scratch for the im2col block
    th = x_ref.shape[2] - 2
    w = x_ref.shape[3] - 2
    cin = x_ref.shape[4]

    slab = x_ref[0, 0]                                    # (tH+2, W+2, Cin)

    # Build the im2col block ONCE in VMEM scratch (9 shifted taps -> columns).
    # The (tH, W, Cin) -> (tH*W, Cin) reshape only collapses leading dims
    # (lane dim Cin unchanged), so it is layout-free.
    for dy in range(3):
        for dx in range(3):
            t = dy * 3 + dx
            im2col_ref[:, t * cin:(t + 1) * cin] = (
                slab[dy:dy + th, dx:dx + w, :].reshape(th * w, cin))

    # Single MXU matmul for the whole 3x3 conv: K = 9*Cin, f32 accumulation.
    patches = im2col_ref[...]                             # (tH*W, 9*Cin)
    y = jnp.dot(patches, w3_ref[...], preferred_element_type=jnp.float32)

    # Folded BN bias + ReLU (BN scale already inside w3).
    y = jnp.maximum(y + bias_ref[...], 0.0)               # (tH*W, Mid) f32

    # 1x1 conv emitted transposed -> (Ncls, tH*W): lane-dense store, output is
    # already NCHW-ordered so no transpose is needed after the kernel.
    out = jax.lax.dot_general(
        w1_ref[...], y.astype(w1_ref.dtype),
        dimension_numbers=(((1,), (1,)), ((), ())),
        preferred_element_type=jnp.float32)               # (Ncls, tH*W)
    out_ref[0] = out.astype(out_ref.dtype)


def _pick_tile_h(H, W, Cin, Mid, Ncls, itemsize=2, budget_bytes=8 << 20):
    """Largest row tile dividing H whose per-step working set fits the budget.

    Row tiles (other than the whole image) keep the flattened spatial width a
    multiple of 128 so the output store stays lane-aligned.
    """
    def step_bytes(th):
        slab = (th + 2) * (W + 2) * Cin * itemsize
        im2col = th * W * 9 * Cin * itemsize
        mid = th * W * Mid * 4
        out = th * W * Ncls * 4
        return 2 * (slab + out) + im2col + mid            # in/out double-buffered

    for th in range(H, 0, -1):
        if H % th:
            continue
        if th != H and (th * W) % 128 != 0:
            continue
        if step_bytes(th) <= budget_bytes:
            return th
    return H


def seghead_forward(x_nchw, w3_oihw, gamma, beta, mean, var, w1_oihw,
                    eps=1e-5, tile_h=None, compute_dtype=jnp.bfloat16):
    """SegHead forward. Input/output are NCHW float32 (PyTorch layout)."""
    N, Cin, H, W = x_nchw.shape
    Mid = w3_oihw.shape[0]
    Ncls = w1_oihw.shape[0]

    if tile_h is None:
        tile_h = _pick_tile_h(H, W, Cin, Mid, Ncls,
                              itemsize=jnp.dtype(compute_dtype).itemsize)
    assert H % tile_h == 0, (H, tile_h)
    n_th = H // tile_h
    assert n_th == 1 or (tile_h * W) % 128 == 0, "row tile must be lane-aligned"

    # ---- parameter prep (tiny, one-time): fold BN scale into the 3x3 weights.
    inv_std = gamma * jax.lax.rsqrt(var + eps)             # (Mid,)
    w3_f = w3_oihw * inv_std[:, None, None, None]          # (Mid, Cin, 3, 3)
    # -> (3, 3, Cin, Mid) -> (9*Cin, Mid), tap-major then channel.
    w3_mat = jnp.transpose(w3_f, (2, 3, 1, 0)).reshape(9 * Cin, Mid)
    w3_mat = w3_mat.astype(compute_dtype)
    bias = (beta - mean * inv_std).reshape(1, Mid).astype(jnp.float32)
    w1_mat = w1_oihw.reshape(Ncls, Mid).astype(compute_dtype)

    # ---- input prep: one fused XLA pass over x (layout + zero pad + cast +
    #      halo row-slab gather). Slabs carry the 1-row halo so the kernel's
    #      BlockSpecs stay plain (non-overlapping) blocked indexing.
    x_nhwc = jnp.transpose(x_nchw, (0, 2, 3, 1)).astype(compute_dtype)
    xpad = jnp.pad(x_nhwc, ((0, 0), (1, 1), (1, 1), (0, 0)))
    if n_th == 1:
        x_slabs = xpad[:, None]                            # (N, 1, H+2, W+2, Cin)
    else:
        x_slabs = jnp.stack(
            [xpad[:, i * tile_h:i * tile_h + tile_h + 2] for i in range(n_th)],
            axis=1)                                        # (N, nTH, tH+2, W+2, Cin)

    out_flat = pl.pallas_call(
        seghead_kernel,
        out_shape=jax.ShapeDtypeStruct((N, Ncls, H * W), jnp.float32),
        grid_spec=pltpu.PrefetchScalarGridSpec(
            num_scalar_prefetch=0,
            grid=(N, n_th),
            in_specs=[
                pl.BlockSpec((1, 1, tile_h + 2, W + 2, Cin),
                             lambda b, i: (b, i, 0, 0, 0)),
                pl.BlockSpec((9 * Cin, Mid), lambda b, i: (0, 0)),
                pl.BlockSpec((1, Mid), lambda b, i: (0, 0)),
                pl.BlockSpec((Ncls, Mid), lambda b, i: (0, 0)),
            ],
            out_specs=pl.BlockSpec((1, Ncls, tile_h * W),
                                   lambda b, i: (b, 0, i)),
            scratch_shapes=[pltpu.VMEM((tile_h * W, 9 * Cin), compute_dtype)],
        ),
        compiler_params=pltpu.CompilerParams(
            dimension_semantics=("parallel", "parallel"),
            vmem_limit_bytes=48 * 1024 * 1024,
        ),
    )(x_slabs, w3_mat, bias, w1_mat)

    # Output is already channel-major; only a free reshape back to NCHW.
    return out_flat.reshape(N, Ncls, H, W)


def seghead_reference(x_nchw, w3_oihw, gamma, beta, mean, var, w1_oihw,
                      eps=1e-5):
    """Pure-JAX reference (matches PyTorch eval-mode semantics)."""
    y = jax.lax.conv_general_dilated(
        x_nchw, w3_oihw, window_strides=(1, 1), padding="SAME",
        dimension_numbers=("NCHW", "OIHW", "NCHW"))
    scale = gamma / jnp.sqrt(var + eps)
    shift = beta - mean * scale
    y = y * scale[None, :, None, None] + shift[None, :, None, None]
    y = jnp.maximum(y, 0.0)
    out = jax.lax.conv_general_dilated(
        y, w1_oihw, window_strides=(1, 1), padding="VALID",
        dimension_numbers=("NCHW", "OIHW", "NCHW"))
    return out


if __name__ == "__main__":
    # Small shapes consistent with SegHead(in_chan=4, mid_chan=32, n_classes=8)
    N, Cin, H, W = 2, 4, 16, 16
    Mid, Ncls = 32, 8

    key = jax.random.PRNGKey(0)
    k = jax.random.split(key, 7)
    x = jax.random.normal(k[0], (N, Cin, H, W), jnp.float32)

    # Deterministic synthetic parameters (shapes per module __init__).
    w3 = jax.random.normal(k[1], (Mid, Cin, 3, 3), jnp.float32) * 0.1
    gamma = 1.0 + 0.1 * jax.random.normal(k[2], (Mid,), jnp.float32)
    beta = 0.1 * jax.random.normal(k[3], (Mid,), jnp.float32)
    mean = 0.1 * jax.random.normal(k[4], (Mid,), jnp.float32)
    var = jnp.abs(jax.random.normal(k[5], (Mid,), jnp.float32)) + 0.5
    w1 = jax.random.normal(k[6], (Ncls, Mid, 1, 1), jnp.float32) * 0.1

    ref = seghead_reference(x, w3, gamma, beta, mean, var, w1)

    # Default (bf16 operands, auto tile -> whole image per grid step here).
    out_bf16 = jax.block_until_ready(
        seghead_forward(x, w3, gamma, beta, mean, var, w1))
    assert out_bf16.shape == (N, Ncls, H, W), out_bf16.shape
    assert jnp.allclose(out_bf16, ref, atol=5e-2, rtol=5e-2), (
        float(jnp.max(jnp.abs(out_bf16 - ref))))

    # f32 operands for a tight numerical check of the same kernel.
    out_f32 = jax.block_until_ready(
        seghead_forward(x, w3, gamma, beta, mean, var, w1,
                        compute_dtype=jnp.float32))
    assert jnp.allclose(out_f32, ref, atol=2e-3, rtol=2e-3), (
        float(jnp.max(jnp.abs(out_f32 - ref))))

    # Exercise the row-tiled path (grid = (N, 2), halo slabs) explicitly.
    out_tiled = jax.block_until_ready(
        seghead_forward(x, w3, gamma, beta, mean, var, w1, tile_h=8))
    assert jnp.allclose(out_tiled, ref, atol=5e-2, rtol=5e-2), (
        float(jnp.max(jnp.abs(out_tiled - ref))))

    print("KERNEL_OK")
</pallas_src>

<mosaic_0001>
module attributes {stable_mosaic.version = 11 : i64} {
  func.func @seghead_kernel(%arg0: i32, %arg1: i32, %arg2: memref<1x1x18x18x4xbf16, #tpu.memory_space<vmem>>, %arg3: memref<36x32xbf16, #tpu.memory_space<vmem>>, %arg4: memref<1x32xf32, #tpu.memory_space<vmem>>, %arg5: memref<8x32xbf16, #tpu.memory_space<vmem>>, %arg6: memref<1x8x256xf32, #tpu.memory_space<vmem>>, %arg7: memref<256x36xbf16, #tpu.memory_space<vmem>>) attributes {dimension_semantics = [#tpu.dimension_semantics<parallel>, #tpu.dimension_semantics<parallel>], iteration_bounds = array<i64: 2, 1>, scalar_prefetch = 0 : i64, scratch_operands = 1 : i64, tpu.core_type = #tpu.core_type<tc>, window_params = [{transform_indices = @transform_0, window_bounds = array<i64: 1, 1, 18, 18, 4>}, {pipeline_mode = #tpu.pipeline_mode<synchronous>, transform_indices = @transform_1, window_bounds = array<i64: 36, 32>}, {pipeline_mode = #tpu.pipeline_mode<synchronous>, transform_indices = @transform_2, window_bounds = array<i64: 1, 32>}, {pipeline_mode = #tpu.pipeline_mode<synchronous>, transform_indices = @transform_3, window_bounds = array<i64: 8, 32>}, {transform_indices = @transform_4, window_bounds = array<i64: 1, 8, 256>}]} {
    %c0 = arith.constant 0 : index
    %c0_0 = arith.constant 0 : index
    %c0_1 = arith.constant 0 : index
    %c0_2 = arith.constant 0 : index
    %c0_3 = arith.constant 0 : index
    %0 = vector.load %arg2[%c0, %c0_0, %c0_1, %c0_2, %c0_3] : memref<1x1x18x18x4xbf16, #tpu.memory_space<vmem>>, vector<1x1x18x18x4xbf16>
    %1 = vector.shape_cast %0 : vector<1x1x18x18x4xbf16> to vector<18x18x4xbf16>
    %2 = vector.extract_strided_slice %1 {offsets = [0, 0, 0], sizes = [16, 16, 4], strides = [1, 1, 1]} : vector<18x18x4xbf16> to vector<16x16x4xbf16>
    %3 = vector.shape_cast %2 : vector<16x16x4xbf16> to vector<256x4xbf16>
    %c0_4 = arith.constant 0 : index
    %c0_5 = arith.constant 0 : index
    %4 = vector.load %arg7[%c0_4, %c0_5] : memref<256x36xbf16, #tpu.memory_space<vmem>>, vector<256x4xbf16>
    tpu.vector_store %arg7[%c0_4, %c0_5], %3 {strides = array<i32>} : memref<256x36xbf16, #tpu.memory_space<vmem>>, vector<256x4xbf16>,
    %5 = vector.extract_strided_slice %1 {offsets = [0, 1, 0], sizes = [16, 16, 4], strides = [1, 1, 1]} : vector<18x18x4xbf16> to vector<16x16x4xbf16>
    %6 = vector.shape_cast %5 : vector<16x16x4xbf16> to vector<256x4xbf16>
    %c0_6 = arith.constant 0 : index
    %c4 = arith.constant 4 : index
    %7 = vector.load %arg7[%c0_6, %c4] : memref<256x36xbf16, #tpu.memory_space<vmem>>, vector<256x4xbf16>
    tpu.vector_store %arg7[%c0_6, %c4], %6 {strides = array<i32>} : memref<256x36xbf16, #tpu.memory_space<vmem>>, vector<256x4xbf16>,
    %8 = vector.extract_strided_slice %1 {offsets = [0, 2, 0], sizes = [16, 16, 4], strides = [1, 1, 1]} : vector<18x18x4xbf16> to vector<16x16x4xbf16>
    %9 = vector.shape_cast %8 : vector<16x16x4xbf16> to vector<256x4xbf16>
    %c0_7 = arith.constant 0 : index
    %c8 = arith.constant 8 : index
    %10 = vector.load %arg7[%c0_7, %c8] : memref<256x36xbf16, #tpu.memory_space<vmem>>, vector<256x4xbf16>
    tpu.vector_store %arg7[%c0_7, %c8], %9 {strides = array<i32>} : memref<256x36xbf16, #tpu.memory_space<vmem>>, vector<256x4xbf16>,
    %11 = vector.extract_strided_slice %1 {offsets = [1, 0, 0], sizes = [16, 16, 4], strides = [1, 1, 1]} : vector<18x18x4xbf16> to vector<16x16x4xbf16>
    %12 = vector.shape_cast %11 : vector<16x16x4xbf16> to vector<256x4xbf16>
    %c0_8 = arith.constant 0 : index
    %c12 = arith.constant 12 : index
    %13 = vector.load %arg7[%c0_8, %c12] : memref<256x36xbf16, #tpu.memory_space<vmem>>, vector<256x4xbf16>
    tpu.vector_store %arg7[%c0_8, %c12], %12 {strides = array<i32>} : memref<256x36xbf16, #tpu.memory_space<vmem>>, vector<256x4xbf16>,
    %14 = vector.extract_strided_slice %1 {offsets = [1, 1, 0], sizes = [16, 16, 4], strides = [1, 1, 1]} : vector<18x18x4xbf16> to vector<16x16x4xbf16>
    %15 = vector.shape_cast %14 : vector<16x16x4xbf16> to vector<256x4xbf16>
    %c0_9 = arith.constant 0 : index
    %c16 = arith.constant 16 : index
    %16 = vector.load %arg7[%c0_9, %c16] : memref<256x36xbf16, #tpu.memory_space<vmem>>, vector<256x4xbf16>
    tpu.vector_store %arg7[%c0_9, %c16], %15 {strides = array<i32>} : memref<256x36xbf16, #tpu.memory_space<vmem>>, vector<256x4xbf16>,
    %17 = vector.extract_strided_slice %1 {offsets = [1, 2, 0], sizes = [16, 16, 4], strides = [1, 1, 1]} : vector<18x18x4xbf16> to vector<16x16x4xbf16>
    %18 = vector.shape_cast %17 : vector<16x16x4xbf16> to vector<256x4xbf16>
    %c0_10 = arith.constant 0 : index
    %c20 = arith.constant 20 : index
    %19 = vector.load %arg7[%c0_10, %c20] : memref<256x36xbf16, #tpu.memory_space<vmem>>, vector<256x4xbf16>
    tpu.vector_store %arg7[%c0_10, %c20], %18 {strides = array<i32>} : memref<256x36xbf16, #tpu.memory_space<vmem>>, vector<256x4xbf16>,
    %20 = vector.extract_strided_slice %1 {offsets = [2, 0, 0], sizes = [16, 16, 4], strides = [1, 1, 1]} : vector<18x18x4xbf16> to vector<16x16x4xbf16>
    %21 = vector.shape_cast %20 : vector<16x16x4xbf16> to vector<256x4xbf16>
    %c0_11 = arith.constant 0 : index
    %c24 = arith.constant 24 : index
    %22 = vector.load %arg7[%c0_11, %c24] : memref<256x36xbf16, #tpu.memory_space<vmem>>, vector<256x4xbf16>
    tpu.vector_store %arg7[%c0_11, %c24], %21 {strides = array<i32>} : memref<256x36xbf16, #tpu.memory_space<vmem>>, vector<256x4xbf16>,
    %23 = vector.extract_strided_slice %1 {offsets = [2, 1, 0], sizes = [16, 16, 4], strides = [1, 1, 1]} : vector<18x18x4xbf16> to vector<16x16x4xbf16>
    %24 = vector.shape_cast %23 : vector<16x16x4xbf16> to vector<256x4xbf16>
    %c0_12 = arith.constant 0 : index
    %c28 = arith.constant 28 : index
    %25 = vector.load %arg7[%c0_12, %c28] : memref<256x36xbf16, #tpu.memory_space<vmem>>, vector<256x4xbf16>
    tpu.vector_store %arg7[%c0_12, %c28], %24 {strides = array<i32>} : memref<256x36xbf16, #tpu.memory_space<vmem>>, vector<256x4xbf16>,
    %26 = vector.extract_strided_slice %1 {offsets = [2, 2, 0], sizes = [16, 16, 4], strides = [1, 1, 1]} : vector<18x18x4xbf16> to vector<16x16x4xbf16>
    %27 = vector.shape_cast %26 : vector<16x16x4xbf16> to vector<256x4xbf16>
    %c0_13 = arith.constant 0 : index
    %c32 = arith.constant 32 : index
    %28 = vector.load %arg7[%c0_13, %c32] : memref<256x36xbf16, #tpu.memory_space<vmem>>, vector<256x4xbf16>
    tpu.vector_store %arg7[%c0_13, %c32], %27 {strides = array<i32>} : memref<256x36xbf16, #tpu.memory_space<vmem>>, vector<256x4xbf16>,
    %c0_14 = arith.constant 0 : index
    %c0_15 = arith.constant 0 : index
    %29 = vector.load %arg7[%c0_14, %c0_15] : memref<256x36xbf16, #tpu.memory_space<vmem>>, vector<256x36xbf16>
    %c0_16 = arith.constant 0 : index
    %c0_17 = arith.constant 0 : index
    %30 = vector.load %arg3[%c0_16, %c0_17] : memref<36x32xbf16, #tpu.memory_space<vmem>>, vector<36x32xbf16>
    %cst = arith.constant dense<0.000000e+00> : vector<256x32xf32>
    %31 = tpu.matmul %29, %30, %cst {dimension_numbers = #tpu.dot_dimension_numbers<[1], [0], [0], [1], [0, 0, 1, 1], [], []>} : vector<256x36xbf16>, vector<36x32xbf16>, vector<256x32xf32> -> vector<256x32xf32>
    %c0_18 = arith.constant 0 : index
    %c0_19 = arith.constant 0 : index
    %32 = vector.load %arg4[%c0_18, %c0_19] : memref<1x32xf32, #tpu.memory_space<vmem>>, vector<1x32xf32>
    %33 = vector.broadcast %32 : vector<1x32xf32> to vector<256x32xf32>
    %34 = arith.addf %31, %33 : vector<256x32xf32>
    %cst_20 = arith.constant 0.000000e+00 : f32
    %35 = vector.broadcast %cst_20 : f32 to vector<256x32xf32>
    %36 = arith.maximumf %34, %35 : vector<256x32xf32>
    %c0_21 = arith.constant 0 : index
    %c0_22 = arith.constant 0 : index
    %37 = vector.load %arg5[%c0_21, %c0_22] : memref<8x32xbf16, #tpu.memory_space<vmem>>, vector<8x32xbf16>
    %38 = arith.truncf %36 : vector<256x32xf32> to vector<256x32xbf16>
    %cst_23 = arith.constant dense<0.000000e+00> : vector<8x256xf32>
    %39 = tpu.matmul %37, %38, %cst_23 {dimension_numbers = #tpu.dot_dimension_numbers<[1], [1], [0], [0], [0, 0, 1, 0], [], []>} : vector<8x32xbf16>, vector<256x32xbf16>, vector<8x256xf32> -> vector<8x256xf32>
    %c0_24 = arith.constant 0 : index
    %c0_25 = arith.constant 0 : index
    %c0_26 = arith.constant 0 : index
    %40 = vector.load %arg6[%c0_24, %c0_25, %c0_26] : memref<1x8x256xf32, #tpu.memory_space<vmem>>, vector<1x8x256xf32>
    %41 = vector.shape_cast %40 : vector<1x8x256xf32> to vector<8x256xf32>
    %42 = vector.shape_cast %39 : vector<8x256xf32> to vector<1x8x256xf32>
    tpu.vector_store %arg6[%c0_24, %c0_25, %c0_26], %42 {strides = array<i32>} : memref<1x8x256xf32, #tpu.memory_space<vmem>>, vector<1x8x256xf32>,
    return
  }
  func.func @transform_0(%arg0: i32, %arg1: i32) -> (i32, i32, i32, i32, i32) {
    %c0_i32 = arith.constant 0 : i32
    %c0_i32_0 = arith.constant 0 : i32
    %c0_i32_1 = arith.constant 0 : i32
    %c0_i32_2 = arith.constant 0 : i32
    return %arg0, %arg1, %c0_i32, %c0_i32_0, %c0_i32_1 : i32, i32, i32, i32, i32
  }
  func.func @transform_1(%arg0: i32, %arg1: i32) -> (i32, i32) {
    %c0_i32 = arith.constant 0 : i32
    %c0_i32_0 = arith.constant 0 : i32
    %c0_i32_1 = arith.constant 0 : i32
    return %c0_i32, %c0_i32_0 : i32, i32
  }
  func.func @transform_2(%arg0: i32, %arg1: i32) -> (i32, i32) {
    %c0_i32 = arith.constant 0 : i32
    %c0_i32_0 = arith.constant 0 : i32
    %c0_i32_1 = arith.constant 0 : i32
    return %c0_i32, %c0_i32_0 : i32, i32
  }
  func.func @transform_3(%arg0: i32, %arg1: i32) -> (i32, i32) {
    %c0_i32 = arith.constant 0 : i32
    %c0_i32_0 = arith.constant 0 : i32
    %c0_i32_1 = arith.constant 0 : i32
    return %c0_i32, %c0_i32_0 : i32, i32
  }
  func.func @transform_4(%arg0: i32, %arg1: i32) -> (i32, i32, i32) {
    %c0_i32 = arith.constant 0 : i32
    %c0_i32_0 = arith.constant 0 : i32
    return %arg0, %c0_i32, %arg1 : i32, i32, i32
  }
}

</mosaic_0001>

<llo_original>
// kernel: tpu_custom_call.1
$region0: #{tpu_custom_call.1}
  #allocation0 [shape = 'u32[]', space=smem, size = 0x4, offset = 0x4, fixed_abs, tag = 'smem constant byte address 0x4 - core index']
  #allocation1 [shape = 'u32[72,128]{1,0:T(1,128)}', space=vmem, size = 0x9000, scoped, tag = 'internal scratch']
  #allocation2 [shape = 'bf16[256,36]{1,0:T(8,128)(2,1)}', space=vmem, size = 0x10000, scoped, tag = 'scratch operand']
  %s0 = inlined_call_operand.vmem [shape: bf16[2,1,18,18,4], index: 0, kind: input, shape index: {}]
  %s1 = inlined_call_operand.vmem [shape: bf16[36,32], index: 1, kind: input, shape index: {}]
  %s2 = inlined_call_operand.vmem [shape: f32[1,32], index: 2, kind: input, shape index: {}]
  %s3 = inlined_call_operand.vmem [shape: bf16[8,32], index: 3, kind: input, shape index: {}]
  %s4 = inlined_call_operand.hbm [shape: f32[2,8,256], index: 4, kind: output, shape index: {}]
  %s5 = sld [smem:[#allocation0]]
  $region49: #{tpu_custom_call.1} parent=0
    _
  %s7 = ssub.s32 1, %s5
  %s8 = scalar_select 0, %s7, %s5
  $region1: #{tpu_custom_call.1} parent=0
    #allocation3 [shape = 'u8[16384]{0}', space=vmem, size = 0x4000, scoped, tag = 'output window, operand 0']
    #allocation4 [shape = 's32[2]{0}', space=sflag, size = 0x8, scoped, tag = 'scoped memory for tpu_custom_call.1']
    %9 = vsyncpa [#allocation4], 0
    %s10 = scalar_lea.sflag [#allocation4], 1
    %11 = vsyncpa %s10, 0
    loop: start=0, step=1, limit=4
    $region2: #{tpu_custom_call.1} parent=1 // loop_pre_header
      _
    $region3: #{tpu_custom_call.1} parent=1 // loop_header
      %s13 = sphi 0, %s17
      %p14 = scmp.ge.s32.totalorder %s13, 4
      %s20 = sphi 0, %s32
      %s21 = sphi 0, %s28
      %s22 = sphi 0, %s20
      %s23 = sphi 0, %s21
      %s24 = sphi 0, %s22
      %s25 = sphi 0, %s23
      %s37 = sphi 0, %s39
      %s40 = sphi 0, %s37
      %s41 = sphi 0, %s40
      %s57 = sphi 0, %s41
      %s61 = sphi 0, %s61
      %s63 = sphi 0, %s61
      %s64 = sphi 0, %s63
      %s78 = sphi 0, %s64
      %s82 = sphi 0, %s82
      %s84 = sphi 0, %s82
      %s85 = sphi 0, %s84
      %s99 = sphi 0, %s85
      %s103 = sphi 0, %s103
      %s105 = sphi 0, %s103
      %s106 = sphi 0, %s105
      %s120 = sphi 0, %s106
      %s128 = sphi 0, %s130
      %s131 = sphi 0, %s128
      %s132 = sphi 0, %s131
      %s148 = sphi 0, %s132
    $region4: #{tpu_custom_call.1} parent=1 // loop_header_branch
      %16 = sbr.rel (%p14) target = $region8
    $region5: #{tpu_custom_call.1} parent=1 // loop_body
      %s18 = ssub.s32 %s13, 1
      %s19 = ssub.s32 %s13, 2
      %s26 = sadd.s32 1, %s21
      %p27 = scmp.ge.s32.totalorder %s26, 1
      %s28 = scalar_select %p27, 0, %s26
      %s29 = sadd.s32 1, %s20
      %s30 = scalar_select %p27, %s29, %s20
      %p31 = scmp.ge.s32.totalorder %s30, 2
      %s32 = scalar_select %p31, 0, %s30
      %s33 = ssub.s32 %s20, %s32
      %s34 = ssub.s32 %s21, %s28
      %s35 = sor.u32 %s33, %s34
      %p36 = scmp.eq.s32.totalorder %s35, 0
      %s38 = sadd.s32 %s37, 1
      %s39 = scalar_select %p36, %s37, %s38
      %p42 = pneg %p36
      %p43 = scmp.eq.s32.totalorder %s13, 1
      %p44 = por %p42, %p43
      %p45 = scmp.ne.s32.totalorder %s37, %s40
      %p46 = scmp.eq.s32.totalorder %s13, 0
      %p47 = por %p45, %p46
      %p48 = scmp.ne.s32.totalorder %s37, %s40
      %p49 = scmp.eq.s32.totalorder %s18, 1
      %p50 = por %p48, %p49
      %p51 = scmp.ne.s32.totalorder %s40, %s41
      %p52 = scmp.eq.s32.totalorder %s18, 0
      %p53 = por %p51, %p52
      %p54 = scmp.ne.s32.totalorder %s40, %s41
      %p55 = scmp.eq.s32.totalorder %s19, 1
      %p56 = por %p54, %p55
      %p58 = scmp.ne.s32.totalorder %s41, %s57
      %p59 = scmp.eq.s32.totalorder %s19, 0
      %p60 = por %p58, %p59
      %s62 = sadd.s32 %s61, 1
      %p65 = scmp.eq.s32.totalorder %s13, 1
      %p66 = scmp.ne.s32.totalorder %s61, %s63
      %p67 = scmp.eq.s32.totalorder %s13, 0
      %p68 = por %p66, %p67
      %p69 = scmp.ne.s32.totalorder %s61, %s63
      %p70 = scmp.eq.s32.totalorder %s18, 1
      %p71 = por %p69, %p70
      %p72 = scmp.ne.s32.totalorder %s63, %s64
      %p73 = scmp.eq.s32.totalorder %s18, 0
      %p74 = por %p72, %p73
      %p75 = scmp.ne.s32.totalorder %s63, %s64
      %p76 = scmp.eq.s32.totalorder %s19, 1
      %p77 = por %p75, %p76
      %p79 = scmp.ne.s32.totalorder %s64, %s78
      %p80 = scmp.eq.s32.totalorder %s19, 0
      %p81 = por %p79, %p80
      %s83 = sadd.s32 %s82, 1
      %p86 = scmp.eq.s32.totalorder %s13, 1
      %p87 = scmp.ne.s32.totalorder %s82, %s84
      %p88 = scmp.eq.s32.totalorder %s13, 0
      %p89 = por %p87, %p88
      %p90 = scmp.ne.s32.totalorder %s82, %s84
      %p91 = scmp.eq.s32.totalorder %s18, 1
      %p92 = por %p90, %p91
      %p93 = scmp.ne.s32.totalorder %s84, %s85
      %p94 = scmp.eq.s32.totalorder %s18, 0
      %p95 = por %p93, %p94
      %p96 = scmp.ne.s32.totalorder %s84, %s85
      %p97 = scmp.eq.s32.totalorder %s19, 1
      %p98 = por %p96, %p97
      %p100 = scmp.ne.s32.totalorder %s85, %s99
      %p101 = scmp.eq.s32.totalorder %s19, 0
      %p102 = por %p100, %p101
      %s104 = sadd.s32 %s103, 1
      %p107 = scmp.eq.s32.totalorder %s13, 1
      %p108 = scmp.ne.s32.totalorder %s103, %s105
      %p109 = scmp.eq.s32.totalorder %s13, 0
      %p110 = por %p108, %p109
      %p111 = scmp.ne.s32.totalorder %s103, %s105
      %p112 = scmp.eq.s32.totalorder %s18, 1
      %p113 = por %p111, %p112
      %p114 = scmp.ne.s32.totalorder %s105, %s106
      %p115 = scmp.eq.s32.totalorder %s18, 0
      %p116 = por %p114, %p115
      %p117 = scmp.ne.s32.totalorder %s105, %s106
      %p118 = scmp.eq.s32.totalorder %s19, 1
      %p119 = por %p117, %p118
      %p121 = scmp.ne.s32.totalorder %s106, %s120
      %p122 = scmp.eq.s32.totalorder %s19, 0
      %p123 = por %p121, %p122
      %s124 = ssub.s32 %s20, %s32
      %s125 = ssub.s32 %s21, %s28
      %s126 = sor.u32 %s124, %s125
      %p127 = scmp.eq.s32.totalorder %s126, 0
      %s129 = sadd.s32 %s128, 1
      %s130 = scalar_select %p127, %s128, %s129
      %p133 = pneg %p127
      %p134 = scmp.eq.s32.totalorder %s13, 1
      %p135 = por %p133, %p134
      %p136 = scmp.ne.s32.totalorder %s128, %s131
      %p137 = scmp.eq.s32.totalorder %s13, 0
      %p138 = por %p136, %p137
      %p139 = scmp.ne.s32.totalorder %s128, %s131
      %p140 = scmp.eq.s32.totalorder %s18, 1
      %p141 = por %p139, %p140
      %p142 = scmp.ne.s32.totalorder %s131, %s132
      %p143 = scmp.eq.s32.totalorder %s18, 0
      %p144 = por %p142, %p143
      %p145 = scmp.ne.s32.totalorder %s131, %s132
      %p146 = scmp.eq.s32.totalorder %s19, 1
      %p147 = por %p145, %p146
      %p149 = scmp.ne.s32.totalorder %s132, %s148
      %p150 = scmp.eq.s32.totalorder %s19, 0
      %p151 = por %p149, %p150
      %p152 = scmp.le.s32.totalorder 1, %s13
      %p153 = scmp.lt.s32.totalorder %s13, 3
      %p154 = pnand %p152, %p153
      %p155 = pneg %p154
      // Predicated region
      $region9: #{tpu_custom_call.1} parent=5 // pred_check
        _
      $region10: #{tpu_custom_call.1} parent=5 // pred_check_branch
        %157 = sbr.rel (%p154) target = $region12
      $region11: #{tpu_custom_call.1} parent=5 // pred_region
        %s158 = ssub.s32 %s13, 1
        // Predicated region
        $region13: #{tpu_custom_call.1} parent=11 // pred_check
          %p159 = pneg %p74
        $region14: #{tpu_custom_call.1} parent=11 // pred_check_branch
          %161 = sbr.rel (%p159) target = $region16
        $region15: #{tpu_custom_call.1} parent=11 // pred_region
          _
        $region16: #{tpu_custom_call.1} parent=11 // pred_fallthru
          _
        // Predicated region
        $region17: #{tpu_custom_call.1} parent=11 // pred_check
          %p162 = pneg %p95
        $region18: #{tpu_custom_call.1} parent=11 // pred_check_branch
          %164 = sbr.rel (%p162) target = $region20
        $region19: #{tpu_custom_call.1} parent=11 // pred_region
          _
        $region20: #{tpu_custom_call.1} parent=11 // pred_fallthru
          _
        // Predicated region
        $region21: #{tpu_custom_call.1} parent=11 // pred_check
          %p165 = pneg %p116
        $region22: #{tpu_custom_call.1} parent=11 // pred_check_branch
          %167 = sbr.rel (%p165) target = $region24
        $region23: #{tpu_custom_call.1} parent=11 // pred_region
          _
        $region24: #{tpu_custom_call.1} parent=11 // pred_fallthru
          _
      $region12: #{tpu_custom_call.1} parent=5 // pred_fallthru
        _
      %p168 = scmp.lt.s32.totalorder %s13, 2
      // Predicated region
      $region25: #{tpu_custom_call.1} parent=5 // pred_check
        %p169 = pneg %p168
      $region26: #{tpu_custom_call.1} parent=5 // pred_check_branch
        %171 = sbr.rel (%p169) target = $region28
      $region27: #{tpu_custom_call.1} parent=5 // pred_region
        // Predicated region
        $region29: #{tpu_custom_call.1} parent=27 // pred_check
          %p172 = pneg %p47
        $region30: #{tpu_custom_call.1} parent=27 // pred_check_branch
          %174 = sbr.rel (%p172) target = $region32
        $region31: #{tpu_custom_call.1} parent=27 // pred_region
          %p175 = scmp.lt.s32.totalorder %s20, 1
          %s176 = scalar_select %p175, %s20, 1
          %p177 = scmp.lt.s32.totalorder %s21, 0
          %s178 = scalar_select %p177, %s21, 0
          %s179 = smul.addr %s178, 54
          %s180 = smul.addr %s176, 54
          %s181 = sadd.s32 %s179, %s180
          %s182 = smul.addr %s181, 4
          %s183 = scalar_lea.vmem %s0, %s182
        $region32: #{tpu_custom_call.1} parent=27 // pred_fallthru
          _
      $region28: #{tpu_custom_call.1} parent=5 // pred_fallthru
        _
      %p184 = scmp.le.s32.totalorder 1, %s13
      %p185 = scmp.lt.s32.totalorder %s13, 3
      %p186 = pnand %p184, %p185
      %p187 = pneg %p186
      // Predicated region
      $region33: #{tpu_custom_call.1} parent=5 // pred_check
        _
      $region34: #{tpu_custom_call.1} parent=5 // pred_check_branch
        %189 = sbr.rel (%p186) target = $region36
      $region35: #{tpu_custom_call.1} parent=5 // pred_region
        %s190 = ssub.s32 %s13, 1
        %p191 = scmp.lt.s32.totalorder %s22, 1
        %s192 = scalar_select %p191, %s22, 1
        %p193 = scmp.lt.s32.totalorder %s23, 0
        %s194 = scalar_select %p193, %s23, 0
        %s195 = smul.addr %s194, 54
        %s196 = smul.addr %s192, 54
        %s197 = sadd.s32 %s195, %s196
        %s198 = smul.addr %s197, 4
        %s199 = scalar_lea.vmem %s0, %s198
        %p200 = pneg %p53
        %p201 = pneg %p50
        %p202 = pneg %p74
        %p203 = pneg %p71
        %p204 = pneg %p95
        %p205 = pneg %p92
        %p206 = pneg %p116
        %p207 = pneg %p113
        %p208 = pneg %p144
        %p209 = pneg %p141
        %s210 = sand.u32 %s131, 1
        %s211 = scalar_lea.sflag [#allocation4], %s210
        %s212 = sand.u32 %s131, 1
        %s213 = smul.addr %s212, 16
        %s214 = scalar_lea.vmem [#allocation3], %s213
        %p215 = scmp.lt.s32.totalorder %s22, 1
        %s216 = scalar_select %p215, %s22, 1
        %p217 = scmp.lt.s32.totalorder %s23, 0
        %s218 = scalar_select %p217, %s23, 0
        %s219 = smul.addr %s218, 54
        %s220 = smul.addr %s216, 54
        %s221 = sadd.s32 %s219, %s220
        %s222 = smul.addr %s221, 4
        %s223 = scalar_lea.vmem %s0, %s222
        %s224 = smul.u32 2, %s23
        %v226 = vld [vmem:[%s223] sm:$0xf]
        %v227 = vld [vmem:[%s223 + $0x4] sm:$0xf]
        %v228 = vld [vmem:[%s223 + $0x8] sm:$0x1]
        %v229 = vld [vmem:[%s223 + $0xc] sm:$0xf]
        %v230 = vld [vmem:[%s223 + $0x10] sm:$0xf]
        %v231 = vld [vmem:[%s223 + $0x14] sm:$0x1]
        %v232 = vld [vmem:[%s223 + $0x18] sm:$0xf]
        %v233 = vld [vmem:[%s223 + $0x1c] sm:$0xf]
        %v234 = vld [vmem:[%s223 + $0x20] sm:$0x1]
        %v235 = vld [vmem:[%s223 + $0x24] sm:$0xf]
        %v236 = vld [vmem:[%s223 + $0x28] sm:$0xf]
        %v237 = vld [vmem:[%s223 + $0x2c] sm:$0x1]
        %v238 = vld [vmem:[%s223 + $0x30] sm:$0xf]
        %v239 = vld [vmem:[%s223 + $0x34] sm:$0xf]
        %v240 = vld [vmem:[%s223 + $0x38] sm:$0x1]
        %v241 = vld [vmem:[%s223 + $0x3c] sm:$0xf]
        %v242 = vld [vmem:[%s223 + $0x40] sm:$0xf]
        %v243 = vld [vmem:[%s223 + $0x44] sm:$0x1]
        %v244 = vld [vmem:[%s223 + $0x48] sm:$0xf]
        %v245 = vld [vmem:[%s223 + $0x4c] sm:$0xf]
        %v246 = vld [vmem:[%s223 + $0x50] sm:$0x1]
        %v247 = vld [vmem:[%s223 + $0x54] sm:$0xf]
        %v248 = vld [vmem:[%s223 + $0x58] sm:$0xf]
        %v249 = vld [vmem:[%s223 + $0x5c] sm:$0x1]
        %v250 = vld [vmem:[%s223 + $0x60] sm:$0xf]
        %v251 = vld [vmem:[%s223 + $0x64] sm:$0xf]
        %v252 = vld [vmem:[%s223 + $0x68] sm:$0x1]
        %v253 = vld [vmem:[%s223 + $0x6c] sm:$0xf]
        %v254 = vld [vmem:[%s223 + $0x70] sm:$0xf]
        %v255 = vld [vmem:[%s223 + $0x74] sm:$0x1]
        %v256 = vld [vmem:[%s223 + $0x78] sm:$0xf]
        %v257 = vld [vmem:[%s223 + $0x7c] sm:$0xf]
        %v258 = vld [vmem:[%s223 + $0x80] sm:$0x1]
        %v259 = vld [vmem:[%s223 + $0x84] sm:$0xf]
        %v260 = vld [vmem:[%s223 + $0x88] sm:$0xf]
        %v261 = vld [vmem:[%s223 + $0x8c] sm:$0x1]
        %v262 = vld [vmem:[%s223 + $0x90] sm:$0xf]
        %v263 = vld [vmem:[%s223 + $0x94] sm:$0xf]
        %v264 = vld [vmem:[%s223 + $0x98] sm:$0x1]
        %v265 = vld [vmem:[%s223 + $0x9c] sm:$0xf]
        %v266 = vld [vmem:[%s223 + $0xa0] sm:$0xf]
        %v267 = vld [vmem:[%s223 + $0xa4] sm:$0x1]
        %v268 = vld [vmem:[%s223 + $0xa8] sm:$0xf]
        %v269 = vld [vmem:[%s223 + $0xac] sm:$0xf]
        %v270 = vld [vmem:[%s223 + $0xb0] sm:$0x1]
        %v271 = vld [vmem:[%s223 + $0xb4] sm:$0xf]
        %v272 = vld [vmem:[%s223 + $0xb8] sm:$0xf]
        %v273 = vld [vmem:[%s223 + $0xbc] sm:$0x1]
        %v274 = vld [vmem:[%s223 + $0xc0] sm:$0xf]
        %v275 = vld [vmem:[%s223 + $0xc4] sm:$0xf]
        %v276 = vld [vmem:[%s223 + $0xc8] sm:$0x1]
        %v277 = vld [vmem:[%s223 + $0xcc] sm:$0xf]
        %v278 = vld [vmem:[%s223 + $0xd0] sm:$0xf]
        %v279 = vld [vmem:[%s223 + $0xd4] sm:$0x1]
        %vm280 = vcmask 27648
        %281 = vst.msk [vmem:[#allocation2] sm:$0xf] %vm280, %v226
        %282 = vst.msk [vmem:[#allocation2 + $0x4] sm:$0xf] %vm280, %v227
        %283 = vst.msk [vmem:[#allocation2 + $0x8] sm:$0xf] %vm280, %v229
        %284 = vst.msk [vmem:[#allocation2 + $0xc] sm:$0xf] %vm280, %v230
        %285 = vst.msk [vmem:[#allocation2 + $0x10] sm:$0xf] %vm280, %v232
        %286 = vst.msk [vmem:[#allocation2 + $0x14] sm:$0xf] %vm280, %v233
        %287 = vst.msk [vmem:[#allocation2 + $0x18] sm:$0xf] %vm280, %v235
        %288 = vst.msk [vmem:[#allocation2 + $0x1c] sm:$0xf] %vm280, %v236
        %289 = vst.msk [vmem:[#allocation2 + $0x20] sm:$0xf] %vm280, %v238
        %290 = vst.msk [vmem:[#allocation2 + $0x24] sm:$0xf] %vm280, %v239
        %291 = vst.msk [vmem:[#allocation2 + $0x28] sm:$0xf] %vm280, %v241
        %292 = vst.msk [vmem:[#allocation2 + $0x2c] sm:$0xf] %vm280, %v242
        %293 = vst.msk [vmem:[#allocation2 + $0x30] sm:$0xf] %vm280, %v244
        %294 = vst.msk [vmem:[#allocation2 + $0x34] sm:$0xf] %vm280, %v245
        %295 = vst.msk [vmem:[#allocation2 + $0x38] sm:$0xf] %vm280, %v247
        %296 = vst.msk [vmem:[#allocation2 + $0x3c] sm:$0xf] %vm280, %v248
        %297 = vst.msk [vmem:[#allocation2 + $0x40] sm:$0xf] %vm280, %v250
        %298 = vst.msk [vmem:[#allocation2 + $0x44] sm:$0xf] %vm280, %v251
        %299 = vst.msk [vmem:[#allocation2 + $0x48] sm:$0xf] %vm280, %v253
        %300 = vst.msk [vmem:[#allocation2 + $0x4c] sm:$0xf] %vm280, %v254
        %301 = vst.msk [vmem:[#allocation2 + $0x50] sm:$0xf] %vm280, %v256
        %302 = vst.msk [vmem:[#allocation2 + $0x54] sm:$0xf] %vm280, %v257
        %303 = vst.msk [vmem:[#allocation2 + $0x58] sm:$0xf] %vm280, %v259
        %304 = vst.msk [vmem:[#allocation2 + $0x5c] sm:$0xf] %vm280, %v260
        %305 = vst.msk [vmem:[#allocation2 + $0x60] sm:$0xf] %vm280, %v262
        %306 = vst.msk [vmem:[#allocation2 + $0x64] sm:$0xf] %vm280, %v263
        %307 = vst.msk [vmem:[#allocation2 + $0x68] sm:$0xf] %vm280, %v265
        %308 = vst.msk [vmem:[#allocation2 + $0x6c] sm:$0xf] %vm280, %v266
        %309 = vst.msk [vmem:[#allocation2 + $0x70] sm:$0xf] %vm280, %v268
        %310 = vst.msk [vmem:[#allocation2 + $0x74] sm:$0xf] %vm280, %v269
        %311 = vst.msk [vmem:[#allocation2 + $0x78] sm:$0xf] %vm280, %v271
        %312 = vst.msk [vmem:[#allocation2 + $0x7c] sm:$0xf] %vm280, %v272
        %vm313 = vsmask.f32 3328
        %vm314 = vsmask.f32 7440
        %vm315 = vmor %vm313, %vm314
        %v317 = vshrl.u32 %v226, 16
        %v319 = vrot.slane %v317, 4
        %v320 = vshll.u32 %v226, 16
        %v322 = vrot.slane %v320, 5
        %v323 = vor.u32 %v319, %v322
        %v324 = vrot.slane %v323, 4
        %v326 = vshll.u32 %v227, 16
        %v328 = vrot.slane %v326, 5
        %v329 = vsel %vm315, %v324, %v328
        %v330 = vshrl.u32 %v227, 16
        %v332 = vrot.slane %v330, 4
        %v333 = vor.u32 %v332, %v328
        %v334 = vrot.slane %v333, 4
        %v336 = vshll.u32 %v228, 16
        %v338 = vrot.slane %v336, 5
        %v339 = vsel %vm315, %v334, %v338
        %v341 = vshrl.u32 %v229, 16
        %v343 = vrot.slane %v341, 4
        %v344 = vshll.u32 %v229, 16
        %v346 = vrot.slane %v344, 5
        %v347 = vor.u32 %v343, %v346
        %v348 = vrot.slane %v347, 4
        %v350 = vshll.u32 %v230, 16
        %v352 = vrot.slane %v350, 5
        %v353 = vsel %vm315, %v348, %v352
        %v354 = vshrl.u32 %v230, 16
        %v356 = vrot.slane %v354, 4
        %v357 = vor.u32 %v356, %v352
        %v358 = vrot.slane %v357, 4
        %v360 = vshll.u32 %v231, 16
        %v362 = vrot.slane %v360, 5
        %v363 = vsel %vm315, %v358, %v362
        %v365 = vshrl.u32 %v232, 16
        %v367 = vrot.slane %v365, 4
        %v368 = vshll.u32 %v232, 16
        %v370 = vrot.slane %v368, 5
        %v371 = vor.u32 %v367, %v370
        %v372 = vrot.slane %v371, 4
        %v374 = vshll.u32 %v233, 16
        %v376 = vrot.slane %v374, 5
        %v377 = vsel %vm315, %v372, %v376
        %v378 = vshrl.u32 %v233, 16
        %v380 = vrot.slane %v378, 4
        %v381 = vor.u32 %v380, %v376
        %v382 = vrot.slane %v381, 4
        %v384 = vshll.u32 %v234, 16
        %v386 = vrot.slane %v384, 5
        %v387 = vsel %vm315, %v382, %v386
        %v389 = vshrl.u32 %v235, 16
        %v391 = vrot.slane %v389, 4
        %v392 = vshll.u32 %v235, 16
        %v394 = vrot.slane %v392, 5
        %v395 = vor.u32 %v391, %v394
        %v396 = vrot.slane %v395, 4
        %v398 = vshll.u32 %v236, 16
        %v400 = vrot.slane %v398, 5
        %v401 = vsel %vm315, %v396, %v400
        %v402 = vshrl.u32 %v236, 16
        %v404 = vrot.slane %v402, 4
        %v405 = vor.u32 %v404, %v400
        %v406 = vrot.slane %v405, 4
        %v408 = vshll.u32 %v237, 16
        %v410 = vrot.slane %v408, 5
        %v411 = vsel %vm315, %v406, %v410
        %v413 = vshrl.u32 %v238, 16
        %v415 = vrot.slane %v413, 4
        %v416 = vshll.u32 %v238, 16
        %v418 = vrot.slane %v416, 5
        %v419 = vor.u32 %v415, %v418
        %v420 = vrot.slane %v419, 4
        %v422 = vshll.u32 %v239, 16
        %v424 = vrot.slane %v422, 5
        %v425 = vsel %vm315, %v420, %v424
        %v426 = vshrl.u32 %v239, 16
        %v428 = vrot.slane %v426, 4
        %v429 = vor.u32 %v428, %v424
        %v430 = vrot.slane %v429, 4
        %v432 = vshll.u32 %v240, 16
        %v434 = vrot.slane %v432, 5
        %v435 = vsel %vm315, %v430, %v434
        %v437 = vshrl.u32 %v241, 16
        %v439 = vrot.slane %v437, 4
        %v440 = vshll.u32 %v241, 16
        %v442 = vrot.slane %v440, 5
        %v443 = vor.u32 %v439, %v442
        %v444 = vrot.slane %v443, 4
        %v446 = vshll.u32 %v242, 16
        %v448 = vrot.slane %v446, 5
        %v449 = vsel %vm315, %v444, %v448
        %v450 = vshrl.u32 %v242, 16
        %v452 = vrot.slane %v450, 4
        %v453 = vor.u32 %v452, %v448
        %v454 = vrot.slane %v453, 4
        %v456 = vshll.u32 %v243, 16
        %v458 = vrot.slane %v456, 5
        %v459 = vsel %vm315, %v454, %v458
        %v461 = vshrl.u32 %v244, 16
        %v463 = vrot.slane %v461, 4
        %v464 = vshll.u32 %v244, 16
        %v466 = vrot.slane %v464, 5
        %v467 = vor.u32 %v463, %v466
        %v468 = vrot.slane %v467, 4
        %v470 = vshll.u32 %v245, 16
        %v472 = vrot.slane %v470, 5
        %v473 = vsel %vm315, %v468, %v472
        %v474 = vshrl.u32 %v245, 16
        %v476 = vrot.slane %v474, 4
        %v477 = vor.u32 %v476, %v472
        %v478 = vrot.slane %v477, 4
        %v480 = vshll.u32 %v246, 16
        %v482 = vrot.slane %v480, 5
        %v483 = vsel %vm315, %v478, %v482
        %v485 = vshrl.u32 %v247, 16
        %v487 = vrot.slane %v485, 4
        %v488 = vshll.u32 %v247, 16
        %v490 = vrot.slane %v488, 5
        %v491 = vor.u32 %v487, %v490
        %v492 = vrot.slane %v491, 4
        %v494 = vshll.u32 %v248, 16
        %v496 = vrot.slane %v494, 5
        %v497 = vsel %vm315, %v492, %v496
        %v498 = vshrl.u32 %v248, 16
        %v500 = vrot.slane %v498, 4
        %v501 = vor.u32 %v500, %v496
        %v502 = vrot.slane %v501, 4
        %v504 = vshll.u32 %v249, 16
        %v506 = vrot.slane %v504, 5
        %v507 = vsel %vm315, %v502, %v506
        %v509 = vshrl.u32 %v250, 16
        %v511 = vrot.slane %v509, 4
        %v512 = vshll.u32 %v250, 16
        %v514 = vrot.slane %v512, 5
        %v515 = vor.u32 %v511, %v514
        %v516 = vrot.slane %v515, 4
        %v518 = vshll.u32 %v251, 16
        %v520 = vrot.slane %v518, 5
        %v521 = vsel %vm315, %v516, %v520
        %v522 = vshrl.u32 %v251, 16
        %v524 = vrot.slane %v522, 4
        %v525 = vor.u32 %v524, %v520
        %v526 = vrot.slane %v525, 4
        %v528 = vshll.u32 %v252, 16
        %v530 = vrot.slane %v528, 5
        %v531 = vsel %vm315, %v526, %v530
        %v533 = vshrl.u32 %v253, 16
        %v535 = vrot.slane %v533, 4
        %v536 = vshll.u32 %v253, 16
        %v538 = vrot.slane %v536, 5
        %v539 = vor.u32 %v535, %v538
        %v540 = vrot.slane %v539, 4
        %v542 = vshll.u32 %v254, 16
        %v544 = vrot.slane %v542, 5
        %v545 = vsel %vm315, %v540, %v544
        %v546 = vshrl.u32 %v254, 16
        %v548 = vrot.slane %v546, 4
        %v549 = vor.u32 %v548, %v544
        %v550 = vrot.slane %v549, 4
        %v552 = vshll.u32 %v255, 16
        %v554 = vrot.slane %v552, 5
        %v555 = vsel %vm315, %v550, %v554
        %v557 = vshrl.u32 %v256, 16
        %v559 = vrot.slane %v557, 4
        %v560 = vshll.u32 %v256, 16
        %v562 = vrot.slane %v560, 5
        %v563 = vor.u32 %v559, %v562
        %v564 = vrot.slane %v563, 4
        %v566 = vshll.u32 %v257, 16
        %v568 = vrot.slane %v566, 5
        %v569 = vsel %vm315, %v564, %v568
        %v570 = vshrl.u32 %v257, 16
        %v572 = vrot.slane %v570, 4
        %v573 = vor.u32 %v572, %v568
        %v574 = vrot.slane %v573, 4
        %v576 = vshll.u32 %v258, 16
        %v578 = vrot.slane %v576, 5
        %v579 = vsel %vm315, %v574, %v578
        %v581 = vshrl.u32 %v259, 16
        %v583 = vrot.slane %v581, 4
        %v584 = vshll.u32 %v259, 16
        %v586 = vrot.slane %v584, 5
        %v587 = vor.u32 %v583, %v586
        %v588 = vrot.slane %v587, 4
        %v590 = vshll.u32 %v260, 16
        %v592 = vrot.slane %v590, 5
        %v593 = vsel %vm315, %v588, %v592
        %v594 = vshrl.u32 %v260, 16
        %v596 = vrot.slane %v594, 4
        %v597 = vor.u32 %v596, %v592
        %v598 = vrot.slane %v597, 4
        %v600 = vshll.u32 %v261, 16
        %v602 = vrot.slane %v600, 5
        %v603 = vsel %vm315, %v598, %v602
        %v605 = vshrl.u32 %v262, 16
        %v607 = vrot.slane %v605, 4
        %v608 = vshll.u32 %v262, 16
        %v610 = vrot.slane %v608, 5
        %v611 = vor.u32 %v607, %v610
        %v612 = vrot.slane %v611, 4
        %v614 = vshll.u32 %v263, 16
        %v616 = vrot.slane %v614, 5
        %v617 = vsel %vm315, %v612, %v616
        %v618 = vshrl.u32 %v263, 16
        %v620 = vrot.slane %v618, 4
        %v621 = vor.u32 %v620, %v616
        %v622 = vrot.slane %v621, 4
        %v624 = vshll.u32 %v264, 16
        %v626 = vrot.slane %v624, 5
        %v627 = vsel %vm315, %v622, %v626
        %v629 = vshrl.u32 %v265, 16
        %v631 = vrot.slane %v629, 4
        %v632 = vshll.u32 %v265, 16
        %v634 = vrot.slane %v632, 5
        %v635 = vor.u32 %v631, %v634
        %v636 = vrot.slane %v635, 4
        %v638 = vshll.u32 %v266, 16
        %v640 = vrot.slane %v638, 5
        %v641 = vsel %vm315, %v636, %v640
        %v642 = vshrl.u32 %v266, 16
        %v644 = vrot.slane %v642, 4
        %v645 = vor.u32 %v644, %v640
        %v646 = vrot.slane %v645, 4
        %v648 = vshll.u32 %v267, 16
        %v650 = vrot.slane %v648, 5
        %v651 = vsel %vm315, %v646, %v650
        %v653 = vshrl.u32 %v268, 16
        %v655 = vrot.slane %v653, 4
        %v656 = vshll.u32 %v268, 16
        %v658 = vrot.slane %v656, 5
        %v659 = vor.u32 %v655, %v658
        %v660 = vrot.slane %v659, 4
        %v662 = vshll.u32 %v269, 16
        %v664 = vrot.slane %v662, 5
        %v665 = vsel %vm315, %v660, %v664
        %v666 = vshrl.u32 %v269, 16
        %v668 = vrot.slane %v666, 4
        %v669 = vor.u32 %v668, %v664
        %v670 = vrot.slane %v669, 4
        %v672 = vshll.u32 %v270, 16
        %v674 = vrot.slane %v672, 5
        %v675 = vsel %vm315, %v670, %v674
        %v677 = vshrl.u32 %v271, 16
        %v679 = vrot.slane %v677, 4
        %v680 = vshll.u32 %v271, 16
        %v682 = vrot.slane %v680, 5
        %v683 = vor.u32 %v679, %v682
        %v684 = vrot.slane %v683, 4
        %v686 = vshll.u32 %v272, 16
        %v688 = vrot.slane %v686, 5
        %v689 = vsel %vm315, %v684, %v688
        %v690 = vshrl.u32 %v272, 16
        %v692 = vrot.slane %v690, 4
        %v693 = vor.u32 %v692, %v688
        %v694 = vrot.slane %v693, 4
        %v696 = vshll.u32 %v273, 16
        %v698 = vrot.slane %v696, 5
        %v699 = vsel %vm315, %v694, %v698
        %700 = vrot.lane.b32.xlu0 %v329, 4
        %v701 = vpop.permute.xlu0 %700
        %702 = vrot.lane.b32.xlu0 %v339, 4
        %v703 = vpop.permute.xlu0 %702
        %704 = vrot.lane.b32.xlu0 %v353, 4
        %v705 = vpop.permute.xlu0 %704
        %706 = vrot.lane.b32.xlu0 %v363, 4
        %v707 = vpop.permute.xlu0 %706
        %708 = vrot.lane.b32.xlu0 %v377, 4
        %v709 = vpop.permute.xlu0 %708
        %710 = vrot.lane.b32.xlu0 %v387, 4
        %v711 = vpop.permute.xlu0 %710
        %712 = vrot.lane.b32.xlu0 %v401, 4
        %v713 = vpop.permute.xlu0 %712
        %714 = vrot.lane.b32.xlu0 %v411, 4
        %v715 = vpop.permute.xlu0 %714
        %716 = vrot.lane.b32.xlu0 %v425, 4
        %v717 = vpop.permute.xlu0 %716
        %718 = vrot.lane.b32.xlu0 %v435, 4
        %v719 = vpop.permute.xlu0 %718
        %720 = vrot.lane.b32.xlu0 %v449, 4
        %v721 = vpop.permute.xlu0 %720
        %722 = vrot.lane.b32.xlu0 %v459, 4
        %v723 = vpop.permute.xlu0 %722
        %724 = vrot.lane.b32.xlu0 %v473, 4
        %v725 = vpop.permute.xlu0 %724
        %726 = vrot.lane.b32.xlu0 %v483, 4
        %v727 = vpop.permute.xlu0 %726
        %728 = vrot.lane.b32.xlu0 %v497, 4
        %v729 = vpop.permute.xlu0 %728
        %730 = vrot.lane.b32.xlu0 %v507, 4
        %v731 = vpop.permute.xlu0 %730
        %732 = vrot.lane.b32.xlu0 %v521, 4
        %v733 = vpop.permute.xlu0 %732
        %734 = vrot.lane.b32.xlu0 %v531, 4
        %v735 = vpop.permute.xlu0 %734
        %736 = vrot.lane.b32.xlu0 %v545, 4
        %v737 = vpop.permute.xlu0 %736
        %738 = vrot.lane.b32.xlu0 %v555, 4
        %v739 = vpop.permute.xlu0 %738
        %740 = vrot.lane.b32.xlu0 %v569, 4
        %v741 = vpop.permute.xlu0 %740
        %742 = vrot.lane.b32.xlu0 %v579, 4
        %v743 = vpop.permute.xlu0 %742
        %744 = vrot.lane.b32.xlu0 %v593, 4
        %v745 = vpop.permute.xlu0 %744
        %746 = vrot.lane.b32.xlu0 %v603, 4
        %v747 = vpop.permute.xlu0 %746
        %748 = vrot.lane.b32.xlu0 %v617, 4
        %v749 = vpop.permute.xlu0 %748
        %750 = vrot.lane.b32.xlu0 %v627, 4
        %v751 = vpop.permute.xlu0 %750
        %752 = vrot.lane.b32.xlu0 %v641, 4
        %v753 = vpop.permute.xlu0 %752
        %754 = vrot.lane.b32.xlu0 %v651, 4
        %v755 = vpop.permute.xlu0 %754
        %756 = vrot.lane.b32.xlu0 %v665, 4
        %v757 = vpop.permute.xlu0 %756
        %758 = vrot.lane.b32.xlu0 %v675, 4
        %v759 = vpop.permute.xlu0 %758
        %760 = vrot.lane.b32.xlu0 %v689, 4
        %v761 = vpop.permute.xlu0 %760
        %762 = vrot.lane.b32.xlu0 %v699, 4
        %v763 = vpop.permute.xlu0 %762
        %vm796 = vcmask 60448
        %797 = vst.msk [vmem:[#allocation2] sm:$0xf] %vm796, %v701
        %798 = vst.msk [vmem:[#allocation2 + $0x4] sm:$0xf] %vm796, %v703
        %799 = vst.msk [vmem:[#allocation2 + $0x8] sm:$0xf] %vm796, %v705
        %800 = vst.msk [vmem:[#allocation2 + $0xc] sm:$0xf] %vm796, %v707
        %801 = vst.msk [vmem:[#allocation2 + $0x10] sm:$0xf] %vm796, %v709
        %802 = vst.msk [vmem:[#allocation2 + $0x14] sm:$0xf] %vm796, %v711
        %803 = vst.msk [vmem:[#allocation2 + $0x18] sm:$0xf] %vm796, %v713
        %804 = vst.msk [vmem:[#allocation2 + $0x1c] sm:$0xf] %vm796, %v715
        %805 = vst.msk [vmem:[#allocation2 + $0x20] sm:$0xf] %vm796, %v717
        %806 = vst.msk [vmem:[#allocation2 + $0x24] sm:$0xf] %vm796, %v719
        %807 = vst.msk [vmem:[#allocation2 + $0x28] sm:$0xf] %vm796, %v721
        %808 = vst.msk [vmem:[#allocation2 + $0x2c] sm:$0xf] %vm796, %v723
        %809 = vst.msk [vmem:[#allocation2 + $0x30] sm:$0xf] %vm796, %v725
        %810 = vst.msk [vmem:[#allocation2 + $0x34] sm:$0xf] %vm796, %v727
        %811 = vst.msk [vmem:[#allocation2 + $0x38] sm:$0xf] %vm796, %v729
        %812 = vst.msk [vmem:[#allocation2 + $0x3c] sm:$0xf] %vm796, %v731
        %813 = vst.msk [vmem:[#allocation2 + $0x40] sm:$0xf] %vm796, %v733
        %814 = vst.msk [vmem:[#allocation2 + $0x44] sm:$0xf] %vm796, %v735
        %815 = vst.msk [vmem:[#allocation2 + $0x48] sm:$0xf] %vm796, %v737
        %816 = vst.msk [vmem:[#allocation2 + $0x4c] sm:$0xf] %vm796, %v739
        %817 = vst.msk [vmem:[#allocation2 + $0x50] sm:$0xf] %vm796, %v741
        %818 = vst.msk [vmem:[#allocation2 + $0x54] sm:$0xf] %vm796, %v743
        %819 = vst.msk [vmem:[#allocation2 + $0x58] sm:$0xf] %vm796, %v745
        %820 = vst.msk [vmem:[#allocation2 + $0x5c] sm:$0xf] %vm796, %v747
        %821 = vst.msk [vmem:[#allocation2 + $0x60] sm:$0xf] %vm796, %v749
        %822 = vst.msk [vmem:[#allocation2 + $0x64] sm:$0xf] %vm796, %v751
        %823 = vst.msk [vmem:[#allocation2 + $0x68] sm:$0xf] %vm796, %v753
        %824 = vst.msk [vmem:[#allocation2 + $0x6c] sm:$0xf] %vm796, %v755
        %825 = vst.msk [vmem:[#allocation2 + $0x70] sm:$0xf] %vm796, %v757
        %826 = vst.msk [vmem:[#allocation2 + $0x74] sm:$0xf] %vm796, %v759
        %827 = vst.msk [vmem:[#allocation2 + $0x78] sm:$0xf] %vm796, %v761
        %828 = vst.msk [vmem:[#allocation2 + $0x7c] sm:$0xf] %vm796, %v763
        %vm877 = vcmask 1042432
        %vm878 = vcmask 1046532
        %vm879 = vmor %vm877, %vm878
        %v880 = vrot.slane %v226, 5
        %v881 = vrot.slane %v880, 4
        %v882 = vrot.slane %v227, 5
        %v883 = vsel %vm879, %v881, %v882
        %v884 = vrot.slane %v882, 4
        %v885 = vrot.slane %v228, 5
        %v886 = vsel %vm879, %v884, %v885
        %v887 = vrot.slane %v229, 5
        %v888 = vrot.slane %v887, 4
        %v889 = vrot.slane %v230, 5
        %v890 = vsel %vm879, %v888, %v889
        %v891 = vrot.slane %v889, 4
        %v892 = vrot.slane %v231, 5
        %v893 = vsel %vm879, %v891, %v892
        %v894 = vrot.slane %v232, 5
        %v895 = vrot.slane %v894, 4
        %v896 = vrot.slane %v233, 5
        %v897 = vsel %vm879, %v895, %v896
        %v898 = vrot.slane %v896, 4
        %v899 = vrot.slane %v234, 5
        %v900 = vsel %vm879, %v898, %v899
        %v901 = vrot.slane %v235, 5
        %v902 = vrot.slane %v901, 4
        %v903 = vrot.slane %v236, 5
        %v904 = vsel %vm879, %v902, %v903
        %v905 = vrot.slane %v903, 4
        %v906 = vrot.slane %v237, 5
        %v907 = vsel %vm879, %v905, %v906
        %v908 = vrot.slane %v238, 5
        %v909 = vrot.slane %v908, 4
        %v910 = vrot.slane %v239, 5
        %v911 = vsel %vm879, %v909, %v910
        %v912 = vrot.slane %v910, 4
        %v913 = vrot.slane %v240, 5
        %v914 = vsel %vm879, %v912, %v913
        %v915 = vrot.slane %v241, 5
        %v916 = vrot.slane %v915, 4
        %v917 = vrot.slane %v242, 5
        %v918 = vsel %vm879, %v916, %v917
        %v919 = vrot.slane %v917, 4
        %v920 = vrot.slane %v243, 5
        %v921 = vsel %vm879, %v919, %v920
        %v922 = vrot.slane %v244, 5
        %v923 = vrot.slane %v922, 4
        %v924 = vrot.slane %v245, 5
        %v925 = vsel %vm879, %v923, %v924
        %v926 = vrot.slane %v924, 4
        %v927 = vrot.slane %v246, 5
        %v928 = vsel %vm879, %v926, %v927
        %v929 = vrot.slane %v247, 5
        %v930 = vrot.slane %v929, 4
        %v931 = vrot.slane %v248, 5
        %v932 = vsel %vm879, %v930, %v931
        %v933 = vrot.slane %v931, 4
        %v934 = vrot.slane %v249, 5
        %v935 = vsel %vm879, %v933, %v934
        %v936 = vrot.slane %v250, 5
        %v937 = vrot.slane %v936, 4
        %v938 = vrot.slane %v251, 5
        %v939 = vsel %vm879, %v937, %v938
        %v940 = vrot.slane %v938, 4
        %v941 = vrot.slane %v252, 5
        %v942 = vsel %vm879, %v940, %v941
        %v943 = vrot.slane %v253, 5
        %v944 = vrot.slane %v943, 4
        %v945 = vrot.slane %v254, 5
        %v946 = vsel %vm879, %v944, %v945
        %v947 = vrot.slane %v945, 4
        %v948 = vrot.slane %v255, 5
        %v949 = vsel %vm879, %v947, %v948
        %v950 = vrot.slane %v256, 5
        %v951 = vrot.slane %v950, 4
        %v952 = vrot.slane %v257, 5
        %v953 = vsel %vm879, %v951, %v952
        %v954 = vrot.slane %v952, 4
        %v955 = vrot.slane %v258, 5
        %v956 = vsel %vm879, %v954, %v955
        %v957 = vrot.slane %v259, 5
        %v958 = vrot.slane %v957, 4
        %v959 = vrot.slane %v260, 5
        %v960 = vsel %vm879, %v958, %v959
        %v961 = vrot.slane %v959, 4
        %v962 = vrot.slane %v261, 5
        %v963 = vsel %vm879, %v961, %v962
        %v964 = vrot.slane %v262, 5
        %v965 = vrot.slane %v964, 4
        %v966 = vrot.slane %v263, 5
        %v967 = vsel %vm879, %v965, %v966
        %v968 = vrot.slane %v966, 4
        %v969 = vrot.slane %v264, 5
        %v970 = vsel %vm879, %v968, %v969
        %v971 = vrot.slane %v265, 5
        %v972 = vrot.slane %v971, 4
        %v973 = vrot.slane %v266, 5
        %v974 = vsel %vm879, %v972, %v973
        %v975 = vrot.slane %v973, 4
        %v976 = vrot.slane %v267, 5
        %v977 = vsel %vm879, %v975, %v976
        %v978 = vrot.slane %v268, 5
        %v979 = vrot.slane %v978, 4
        %v980 = vrot.slane %v269, 5
        %v981 = vsel %vm879, %v979, %v980
        %v982 = vrot.slane %v980, 4
        %v983 = vrot.slane %v270, 5
        %v984 = vsel %vm879, %v982, %v983
        %v985 = vrot.slane %v271, 5
        %v986 = vrot.slane %v985, 4
        %v987 = vrot.slane %v272, 5
        %v988 = vsel %vm879, %v986, %v987
        %v989 = vrot.slane %v987, 4
        %v990 = vrot.slane %v273, 5
        %v991 = vsel %vm879, %v989, %v990
        %992 = vrot.lane.b32.xlu0 %v883, 8
        %v993 = vpop.permute.xlu0 %992
        %994 = vrot.lane.b32.xlu0 %v886, 8
        %v995 = vpop.permute.xlu0 %994
        %996 = vrot.lane.b32.xlu0 %v890, 8
        %v997 = vpop.permute.xlu0 %996
        %998 = vrot.lane.b32.xlu0 %v893, 8
        %v999 = vpop.permute.xlu0 %998
        %1000 = vrot.lane.b32.xlu0 %v897, 8
        %v1001 = vpop.permute.xlu0 %1000
        %1002 = vrot.lane.b32.xlu0 %v900, 8
        %v1003 = vpop.permute.xlu0 %1002
        %1004 = vrot.lane.b32.xlu0 %v904, 8
        %v1005 = vpop.permute.xlu0 %1004
        %1006 = vrot.lane.b32.xlu0 %v907, 8
        %v1007 = vpop.permute.xlu0 %1006
        %1008 = vrot.lane.b32.xlu0 %v911, 8
        %v1009 = vpop.permute.xlu0 %1008
        %1010 = vrot.lane.b32.xlu0 %v914, 8
        %v1011 = vpop.permute.xlu0 %1010
        %1012 = vrot.lane.b32.xlu0 %v918, 8
        %v1013 = vpop.permute.xlu0 %1012
        %1014 = vrot.lane.b32.xlu0 %v921, 8
        %v1015 = vpop.permute.xlu0 %1014
        %1016 = vrot.lane.b32.xlu0 %v925, 8
        %v1017 = vpop.permute.xlu0 %1016
        %1018 = vrot.lane.b32.xlu0 %v928, 8
        %v1019 = vpop.permute.xlu0 %1018
        %1020 = vrot.lane.b32.xlu0 %v932, 8
        %v1021 = vpop.permute.xlu0 %1020
        %1022 = vrot.lane.b32.xlu0 %v935, 8
        %v1023 = vpop.permute.xlu0 %1022
        %1024 = vrot.lane.b32.xlu0 %v939, 8
        %v1025 = vpop.permute.xlu0 %1024
        %1026 = vrot.lane.b32.xlu0 %v942, 8
        %v1027 = vpop.permute.xlu0 %1026
        %1028 = vrot.lane.b32.xlu0 %v946, 8
        %v1029 = vpop.permute.xlu0 %1028
        %1030 = vrot.lane.b32.xlu0 %v949, 8
        %v1031 = vpop.permute.xlu0 %1030
        %1032 = vrot.lane.b32.xlu0 %v953, 8
        %v1033 = vpop.permute.xlu0 %1032
        %1034 = vrot.lane.b32.xlu0 %v956, 8
        %v1035 = vpop.permute.xlu0 %1034
        %1036 = vrot.lane.b32.xlu0 %v960, 8
        %v1037 = vpop.permute.xlu0 %1036
        %1038 = vrot.lane.b32.xlu0 %v963, 8
        %v1039 = vpop.permute.xlu0 %1038
        %1040 = vrot.lane.b32.xlu0 %v967, 8
        %v1041 = vpop.permute.xlu0 %1040
        %1042 = vrot.lane.b32.xlu0 %v970, 8
        %v1043 = vpop.permute.xlu0 %1042
        %1044 = vrot.lane.b32.xlu0 %v974, 8
        %v1045 = vpop.permute.xlu0 %1044
        %1046 = vrot.lane.b32.xlu0 %v977, 8
        %v1047 = vpop.permute.xlu0 %1046
        %1048 = vrot.lane.b32.xlu0 %v981, 8
        %v1049 = vpop.permute.xlu0 %1048
        %1050 = vrot.lane.b32.xlu0 %v984, 8
        %v1051 = vpop.permute.xlu0 %1050
        %1052 = vrot.lane.b32.xlu0 %v988, 8
        %v1053 = vpop.permute.xlu0 %1052
        %1054 = vrot.lane.b32.xlu0 %v991, 8
        %v1055 = vpop.permute.xlu0 %1054
        %vm1088 = vcmask 93248
        %1089 = vst.msk [vmem:[#allocation2] sm:$0xf] %vm1088, %v993
        %1090 = vst.msk [vmem:[#allocation2 + $0x4] sm:$0xf] %vm1088, %v995
        %1091 = vst.msk [vmem:[#allocation2 + $0x8] sm:$0xf] %vm1088, %v997
        %1092 = vst.msk [vmem:[#allocation2 + $0xc] sm:$0xf] %vm1088, %v999
        %1093 = vst.msk [vmem:[#allocation2 + $0x10] sm:$0xf] %vm1088, %v1001
        %1094 = vst.msk [vmem:[#allocation2 + $0x14] sm:$0xf] %vm1088, %v1003
        %1095 = vst.msk [vmem:[#allocation2 + $0x18] sm:$0xf] %vm1088, %v1005
        %1096 = vst.msk [vmem:[#allocation2 + $0x1c] sm:$0xf] %vm1088, %v1007
        %1097 = vst.msk [vmem:[#allocation2 + $0x20] sm:$0xf] %vm1088, %v1009
        %1098 = vst.msk [vmem:[#allocation2 + $0x24] sm:$0xf] %vm1088, %v1011
        %1099 = vst.msk [vmem:[#allocation2 + $0x28] sm:$0xf] %vm1088, %v1013
        %1100 = vst.msk [vmem:[#allocation2 + $0x2c] sm:$0xf] %vm1088, %v1015
        %1101 = vst.msk [vmem:[#allocation2 + $0x30] sm:$0xf] %vm1088, %v1017
        %1102 = vst.msk [vmem:[#allocation2 + $0x34] sm:$0xf] %vm1088, %v1019
        %1103 = vst.msk [vmem:[#allocation2 + $0x38] sm:$0xf] %vm1088, %v1021
        %1104 = vst.msk [vmem:[#allocation2 + $0x3c] sm:$0xf] %vm1088, %v1023
        %1105 = vst.msk [vmem:[#allocation2 + $0x40] sm:$0xf] %vm1088, %v1025
        %1106 = vst.msk [vmem:[#allocation2 + $0x44] sm:$0xf] %vm1088, %v1027
        %1107 = vst.msk [vmem:[#allocation2 + $0x48] sm:$0xf] %vm1088, %v1029
        %1108 = vst.msk [vmem:[#allocation2 + $0x4c] sm:$0xf] %vm1088, %v1031
        %1109 = vst.msk [vmem:[#allocation2 + $0x50] sm:$0xf] %vm1088, %v1033
        %1110 = vst.msk [vmem:[#allocation2 + $0x54] sm:$0xf] %vm1088, %v1035
        %1111 = vst.msk [vmem:[#allocation2 + $0x58] sm:$0xf] %vm1088, %v1037
        %1112 = vst.msk [vmem:[#allocation2 + $0x5c] sm:$0xf] %vm1088, %v1039
        %1113 = vst.msk [vmem:[#allocation2 + $0x60] sm:$0xf] %vm1088, %v1041
        %1114 = vst.msk [vmem:[#allocation2 + $0x64] sm:$0xf] %vm1088, %v1043
        %1115 = vst.msk [vmem:[#allocation2 + $0x68] sm:$0xf] %vm1088, %v1045
        %1116 = vst.msk [vmem:[#allocation2 + $0x6c] sm:$0xf] %vm1088, %v1047
        %1117 = vst.msk [vmem:[#allocation2 + $0x70] sm:$0xf] %vm1088, %v1049
        %1118 = vst.msk [vmem:[#allocation2 + $0x74] sm:$0xf] %vm1088, %v1051
        %1119 = vst.msk [vmem:[#allocation2 + $0x78] sm:$0xf] %vm1088, %v1053
        %1120 = vst.msk [vmem:[#allocation2 + $0x7c] sm:$0xf] %vm1088, %v1055
        %1123 = vrot.lane.b32.xlu0 %v229, 12
        %v1124 = vpop.permute.xlu0 %1123
        %1125 = vrot.lane.b32.xlu0 %v230, 12
        %v1126 = vpop.permute.xlu0 %1125
        %1127 = vrot.lane.b32.xlu0 %v232, 12
        %v1128 = vpop.permute.xlu0 %1127
        %1129 = vrot.lane.b32.xlu0 %v233, 12
        %v1130 = vpop.permute.xlu0 %1129
        %1131 = vrot.lane.b32.xlu0 %v235, 12
        %v1132 = vpop.permute.xlu0 %1131
        %1133 = vrot.lane.b32.xlu0 %v236, 12
        %v1134 = vpop.permute.xlu0 %1133
        %1135 = vrot.lane.b32.xlu0 %v238, 12
        %v1136 = vpop.permute.xlu0 %1135
        %1137 = vrot.lane.b32.xlu0 %v239, 12
        %v1138 = vpop.permute.xlu0 %1137
        %1139 = vrot.lane.b32.xlu0 %v241, 12
        %v1140 = vpop.permute.xlu0 %1139
        %1141 = vrot.lane.b32.xlu0 %v242, 12
        %v1142 = vpop.permute.xlu0 %1141
        %1143 = vrot.lane.b32.xlu0 %v244, 12
        %v1144 = vpop.permute.xlu0 %1143
        %1145 = vrot.lane.b32.xlu0 %v245, 12
        %v1146 = vpop.permute.xlu0 %1145
        %1147 = vrot.lane.b32.xlu0 %v247, 12
        %v1148 = vpop.permute.xlu0 %1147
        %1149 = vrot.lane.b32.xlu0 %v248, 12
        %v1150 = vpop.permute.xlu0 %1149
        %1151 = vrot.lane.b32.xlu0 %v250, 12
        %v1152 = vpop.permute.xlu0 %1151
        %1153 = vrot.lane.b32.xlu0 %v251, 12
        %v1154 = vpop.permute.xlu0 %1153
        %1155 = vrot.lane.b32.xlu0 %v253, 12
        %v1156 = vpop.permute.xlu0 %1155
        %1157 = vrot.lane.b32.xlu0 %v254, 12
        %v1158 = vpop.permute.xlu0 %1157
        %1159 = vrot.lane.b32.xlu0 %v256, 12
        %v1160 = vpop.permute.xlu0 %1159
        %1161 = vrot.lane.b32.xlu0 %v257, 12
        %v1162 = vpop.permute.xlu0 %1161
        %1163 = vrot.lane.b32.xlu0 %v259, 12
        %v1164 = vpop.permute.xlu0 %1163
        %1165 = vrot.lane.b32.xlu0 %v260, 12
        %v1166 = vpop.permute.xlu0 %1165
        %1167 = vrot.lane.b32.xlu0 %v262, 12
        %v1168 = vpop.permute.xlu0 %1167
        %1169 = vrot.lane.b32.xlu0 %v263, 12
        %v1170 = vpop.permute.xlu0 %1169
        %1171 = vrot.lane.b32.xlu0 %v265, 12
        %v1172 = vpop.permute.xlu0 %1171
        %1173 = vrot.lane.b32.xlu0 %v266, 12
        %v1174 = vpop.permute.xlu0 %1173
        %1175 = vrot.lane.b32.xlu0 %v268, 12
        %v1176 = vpop.permute.xlu0 %1175
        %1177 = vrot.lane.b32.xlu0 %v269, 12
        %v1178 = vpop.permute.xlu0 %1177
        %1179 = vrot.lane.b32.xlu0 %v271, 12
        %v1180 = vpop.permute.xlu0 %1179
        %1181 = vrot.lane.b32.xlu0 %v272, 12
        %v1182 = vpop.permute.xlu0 %1181
        %1183 = vrot.lane.b32.xlu0 %v274, 12
        %v1184 = vpop.permute.xlu0 %1183
        %1185 = vrot.lane.b32.xlu0 %v275, 12
        %v1186 = vpop.permute.xlu0 %1185
        %vm1219 = vcmask 126048
        %1220 = vst.msk [vmem:[#allocation2] sm:$0xf] %vm1219, %v1124
        %1221 = vst.msk [vmem:[#allocation2 + $0x4] sm:$0xf] %vm1219, %v1126
        %1222 = vst.msk [vmem:[#allocation2 + $0x8] sm:$0xf] %vm1219, %v1128
        %1223 = vst.msk [vmem:[#allocation2 + $0xc] sm:$0xf] %vm1219, %v1130
        %1224 = vst.msk [vmem:[#allocation2 + $0x10] sm:$0xf] %vm1219, %v1132
        %1225 = vst.msk [vmem:[#allocation2 + $0x14] sm:$0xf] %vm1219, %v1134
        %1226 = vst.msk [vmem:[#allocation2 + $0x18] sm:$0xf] %vm1219, %v1136
        %1227 = vst.msk [vmem:[#allocation2 + $0x1c] sm:$0xf] %vm1219, %v1138
        %1228 = vst.msk [vmem:[#allocation2 + $0x20] sm:$0xf] %vm1219, %v1140
        %1229 = vst.msk [vmem:[#allocation2 + $0x24] sm:$0xf] %vm1219, %v1142
        %1230 = vst.msk [vmem:[#allocation2 + $0x28] sm:$0xf] %vm1219, %v1144
        %1231 = vst.msk [vmem:[#allocation2 + $0x2c] sm:$0xf] %vm1219, %v1146
        %1232 = vst.msk [vmem:[#allocation2 + $0x30] sm:$0xf] %vm1219, %v1148
        %1233 = vst.msk [vmem:[#allocation2 + $0x34] sm:$0xf] %vm1219, %v1150
        %1234 = vst.msk [vmem:[#allocation2 + $0x38] sm:$0xf] %vm1219, %v1152
        %1235 = vst.msk [vmem:[#allocation2 + $0x3c] sm:$0xf] %vm1219, %v1154
        %1236 = vst.msk [vmem:[#allocation2 + $0x40] sm:$0xf] %vm1219, %v1156
        %1237 = vst.msk [vmem:[#allocation2 + $0x44] sm:$0xf] %vm1219, %v1158
        %1238 = vst.msk [vmem:[#allocation2 + $0x48] sm:$0xf] %vm1219, %v1160
        %1239 = vst.msk [vmem:[#allocation2 + $0x4c] sm:$0xf] %vm1219, %v1162
        %1240 = vst.msk [vmem:[#allocation2 + $0x50] sm:$0xf] %vm1219, %v1164
        %1241 = vst.msk [vmem:[#allocation2 + $0x54] sm:$0xf] %vm1219, %v1166
        %1242 = vst.msk [vmem:[#allocation2 + $0x58] sm:$0xf] %vm1219, %v1168
        %1243 = vst.msk [vmem:[#allocation2 + $0x5c] sm:$0xf] %vm1219, %v1170
        %1244 = vst.msk [vmem:[#allocation2 + $0x60] sm:$0xf] %vm1219, %v1172
        %1245 = vst.msk [vmem:[#allocation2 + $0x64] sm:$0xf] %vm1219, %v1174
        %1246 = vst.msk [vmem:[#allocation2 + $0x68] sm:$0xf] %vm1219, %v1176
        %1247 = vst.msk [vmem:[#allocation2 + $0x6c] sm:$0xf] %vm1219, %v1178
        %1248 = vst.msk [vmem:[#allocation2 + $0x70] sm:$0xf] %vm1219, %v1180
        %1249 = vst.msk [vmem:[#allocation2 + $0x74] sm:$0xf] %vm1219, %v1182
        %1250 = vst.msk [vmem:[#allocation2 + $0x78] sm:$0xf] %vm1219, %v1184
        %1251 = vst.msk [vmem:[#allocation2 + $0x7c] sm:$0xf] %vm1219, %v1186
        %v1253 = vshrl.u32 %v274, 16
        %v1255 = vrot.slane %v1253, 4
        %v1256 = vshll.u32 %v274, 16
        %v1258 = vrot.slane %v1256, 5
        %v1259 = vor.u32 %v1255, %v1258
        %v1260 = vrot.slane %v1259, 4
        %v1262 = vshll.u32 %v275, 16
        %v1264 = vrot.slane %v1262, 5
        %v1265 = vsel %vm315, %v1260, %v1264
        %v1266 = vshrl.u32 %v275, 16
        %v1268 = vrot.slane %v1266, 4
        %v1269 = vor.u32 %v1268, %v1264
        %v1270 = vrot.slane %v1269, 4
        %v1272 = vshll.u32 %v276, 16
        %v1274 = vrot.slane %v1272, 5
        %v1275 = vsel %vm315, %v1270, %v1274
        %1276 = vrot.lane.b32.xlu0 %v353, 16
        %v1277 = vpop.permute.xlu0 %1276
        %1278 = vrot.lane.b32.xlu0 %v363, 16
        %v1279 = vpop.permute.xlu0 %1278
        %1280 = vrot.lane.b32.xlu0 %v377, 16
        %v1281 = vpop.permute.xlu0 %1280
        %1282 = vrot.lane.b32.xlu0 %v387, 16
        %v1283 = vpop.permute.xlu0 %1282
        %1284 = vrot.lane.b32.xlu0 %v401, 16
        %v1285 = vpop.permute.xlu0 %1284
        %1286 = vrot.lane.b32.xlu0 %v411, 16
        %v1287 = vpop.permute.xlu0 %1286
        %1288 = vrot.lane.b32.xlu0 %v425, 16
        %v1289 = vpop.permute.xlu0 %1288
        %1290 = vrot.lane.b32.xlu0 %v435, 16
        %v1291 = vpop.permute.xlu0 %1290
        %1292 = vrot.lane.b32.xlu0 %v449, 16
        %v1293 = vpop.permute.xlu0 %1292
        %1294 = vrot.lane.b32.xlu0 %v459, 16
        %v1295 = vpop.permute.xlu0 %1294
        %1296 = vrot.lane.b32.xlu0 %v473, 16
        %v1297 = vpop.permute.xlu0 %1296
        %1298 = vrot.lane.b32.xlu0 %v483, 16
        %v1299 = vpop.permute.xlu0 %1298
        %1300 = vrot.lane.b32.xlu0 %v497, 16
        %v1301 = vpop.permute.xlu0 %1300
        %1302 = vrot.lane.b32.xlu0 %v507, 16
        %v1303 = vpop.permute.xlu0 %1302
        %1304 = vrot.lane.b32.xlu0 %v521, 16
        %v1305 = vpop.permute.xlu0 %1304
        %1306 = vrot.lane.b32.xlu0 %v531, 16
        %v1307 = vpop.permute.xlu0 %1306
        %1308 = vrot.lane.b32.xlu0 %v545, 16
        %v1309 = vpop.permute.xlu0 %1308
        %1310 = vrot.lane.b32.xlu0 %v555, 16
        %v1311 = vpop.permute.xlu0 %1310
        %1312 = vrot.lane.b32.xlu0 %v569, 16
        %v1313 = vpop.permute.xlu0 %1312
        %1314 = vrot.lane.b32.xlu0 %v579, 16
        %v1315 = vpop.permute.xlu0 %1314
        %1316 = vrot.lane.b32.xlu0 %v593, 16
        %v1317 = vpop.permute.xlu0 %1316
        %1318 = vrot.lane.b32.xlu0 %v603, 16
        %v1319 = vpop.permute.xlu0 %1318
        %1320 = vrot.lane.b32.xlu0 %v617, 16
        %v1321 = vpop.permute.xlu0 %1320
        %1322 = vrot.lane.b32.xlu0 %v627, 16
        %v1323 = vpop.permute.xlu0 %1322
        %1324 = vrot.lane.b32.xlu0 %v641, 16
        %v1325 = vpop.permute.xlu0 %1324
        %1326 = vrot.lane.b32.xlu0 %v651, 16
        %v1327 = vpop.permute.xlu0 %1326
        %1328 = vrot.lane.b32.xlu0 %v665, 16
        %v1329 = vpop.permute.xlu0 %1328
        %1330 = vrot.lane.b32.xlu0 %v675, 16
        %v1331 = vpop.permute.xlu0 %1330
        %1332 = vrot.lane.b32.xlu0 %v689, 16
        %v1333 = vpop.permute.xlu0 %1332
        %1334 = vrot.lane.b32.xlu0 %v699, 16
        %v1335 = vpop.permute.xlu0 %1334
        %1336 = vrot.lane.b32.xlu0 %v1265, 16
        %v1337 = vpop.permute.xlu0 %1336
        %1338 = vrot.lane.b32.xlu0 %v1275, 16
        %v1339 = vpop.permute.xlu0 %1338
        %vm1372 = vcmask 158848
        %1373 = vst.msk [vmem:[#allocation2] sm:$0xf] %vm1372, %v1277
        %1374 = vst.msk [vmem:[#allocation2 + $0x4] sm:$0xf] %vm1372, %v1279
        %1375 = vst.msk [vmem:[#allocation2 + $0x8] sm:$0xf] %vm1372, %v1281
        %1376 = vst.msk [vmem:[#allocation2 + $0xc] sm:$0xf] %vm1372, %v1283
        %1377 = vst.msk [vmem:[#allocation2 + $0x10] sm:$0xf] %vm1372, %v1285
        %1378 = vst.msk [vmem:[#allocation2 + $0x14] sm:$0xf] %vm1372, %v1287
        %1379 = vst.msk [vmem:[#allocation2 + $0x18] sm:$0xf] %vm1372, %v1289
        %1380 = vst.msk [vmem:[#allocation2 + $0x1c] sm:$0xf] %vm1372, %v1291
        %1381 = vst.msk [vmem:[#allocation2 + $0x20] sm:$0xf] %vm1372, %v1293
        %1382 = vst.msk [vmem:[#allocation2 + $0x24] sm:$0xf] %vm1372, %v1295
        %1383 = vst.msk [vmem:[#allocation2 + $0x28] sm:$0xf] %vm1372, %v1297
        %1384 = vst.msk [vmem:[#allocation2 + $0x2c] sm:$0xf] %vm1372, %v1299
        %1385 = vst.msk [vmem:[#allocation2 + $0x30] sm:$0xf] %vm1372, %v1301
        %1386 = vst.msk [vmem:[#allocation2 + $0x34] sm:$0xf] %vm1372, %v1303
        %1387 = vst.msk [vmem:[#allocation2 + $0x38] sm:$0xf] %vm1372, %v1305
        %1388 = vst.msk [vmem:[#allocation2 + $0x3c] sm:$0xf] %vm1372, %v1307
        %1389 = vst.msk [vmem:[#allocation2 + $0x40] sm:$0xf] %vm1372, %v1309
        %1390 = vst.msk [vmem:[#allocation2 + $0x44] sm:$0xf] %vm1372, %v1311
        %1391 = vst.msk [vmem:[#allocation2 + $0x48] sm:$0xf] %vm1372, %v1313
        %1392 = vst.msk [vmem:[#allocation2 + $0x4c] sm:$0xf] %vm1372, %v1315
        %1393 = vst.msk [vmem:[#allocation2 + $0x50] sm:$0xf] %vm1372, %v1317
        %1394 = vst.msk [vmem:[#allocation2 + $0x54] sm:$0xf] %vm1372, %v1319
        %1395 = vst.msk [vmem:[#allocation2 + $0x58] sm:$0xf] %vm1372, %v1321
        %1396 = vst.msk [vmem:[#allocation2 + $0x5c] sm:$0xf] %vm1372, %v1323
        %1397 = vst.msk [vmem:[#allocation2 + $0x60] sm:$0xf] %vm1372, %v1325
        %1398 = vst.msk [vmem:[#allocation2 + $0x64] sm:$0xf] %vm1372, %v1327
        %1399 = vst.msk [vmem:[#allocation2 + $0x68] sm:$0xf] %vm1372, %v1329
        %1400 = vst.msk [vmem:[#allocation2 + $0x6c] sm:$0xf] %vm1372, %v1331
        %1401 = vst.msk [vmem:[#allocation2 + $0x70] sm:$0xf] %vm1372, %v1333
        %1402 = vst.msk [vmem:[#allocation2 + $0x74] sm:$0xf] %vm1372, %v1335
        %1403 = vst.msk [vmem:[#allocation2 + $0x78] sm:$0xf] %vm1372, %v1337
        %1404 = vst.msk [vmem:[#allocation2 + $0x7c] sm:$0xf] %vm1372, %v1339
        %v1406 = vrot.slane %v274, 5
        %v1407 = vrot.slane %v1406, 4
        %v1408 = vrot.slane %v275, 5
        %v1409 = vsel %vm879, %v1407, %v1408
        %v1410 = vrot.slane %v1408, 4
        %v1411 = vrot.slane %v276, 5
        %v1412 = vsel %vm879, %v1410, %v1411
        %1413 = vrot.lane.b32.xlu0 %v890, 20
        %v1414 = vpop.permute.xlu0 %1413
        %1415 = vrot.lane.b32.xlu0 %v893, 20
        %v1416 = vpop.permute.xlu0 %1415
        %1417 = vrot.lane.b32.xlu0 %v897, 20
        %v1418 = vpop.permute.xlu0 %1417
        %1419 = vrot.lane.b32.xlu0 %v900, 20
        %v1420 = vpop.permute.xlu0 %1419
        %1421 = vrot.lane.b32.xlu0 %v904, 20
        %v1422 = vpop.permute.xlu0 %1421
        %1423 = vrot.lane.b32.xlu0 %v907, 20
        %v1424 = vpop.permute.xlu0 %1423
        %1425 = vrot.lane.b32.xlu0 %v911, 20
        %v1426 = vpop.permute.xlu0 %1425
        %1427 = vrot.lane.b32.xlu0 %v914, 20
        %v1428 = vpop.permute.xlu0 %1427
        %1429 = vrot.lane.b32.xlu0 %v918, 20
        %v1430 = vpop.permute.xlu0 %1429
        %1431 = vrot.lane.b32.xlu0 %v921, 20
        %v1432 = vpop.permute.xlu0 %1431
        %1433 = vrot.lane.b32.xlu0 %v925, 20
        %v1434 = vpop.permute.xlu0 %1433
        %1435 = vrot.lane.b32.xlu0 %v928, 20
        %v1436 = vpop.permute.xlu0 %1435
        %1437 = vrot.lane.b32.xlu0 %v932, 20
        %v1438 = vpop.permute.xlu0 %1437
        %1439 = vrot.lane.b32.xlu0 %v935, 20
        %v1440 = vpop.permute.xlu0 %1439
        %1441 = vrot.lane.b32.xlu0 %v939, 20
        %v1442 = vpop.permute.xlu0 %1441
        %1443 = vrot.lane.b32.xlu0 %v942, 20
        %v1444 = vpop.permute.xlu0 %1443
        %1445 = vrot.lane.b32.xlu0 %v946, 20
        %v1446 = vpop.permute.xlu0 %1445
        %1447 = vrot.lane.b32.xlu0 %v949, 20
        %v1448 = vpop.permute.xlu0 %1447
        %1449 = vrot.lane.b32.xlu0 %v953, 20
        %v1450 = vpop.permute.xlu0 %1449
        %1451 = vrot.lane.b32.xlu0 %v956, 20
        %v1452 = vpop.permute.xlu0 %1451
        %1453 = vrot.lane.b32.xlu0 %v960, 20
        %v1454 = vpop.permute.xlu0 %1453
        %1455 = vrot.lane.b32.xlu0 %v963, 20
        %v1456 = vpop.permute.xlu0 %1455
        %1457 = vrot.lane.b32.xlu0 %v967, 20
        %v1458 = vpop.permute.xlu0 %1457
        %1459 = vrot.lane.b32.xlu0 %v970, 20
        %v1460 = vpop.permute.xlu0 %1459
        %1461 = vrot.lane.b32.xlu0 %v974, 20
        %v1462 = vpop.permute.xlu0 %1461
        %1463 = vrot.lane.b32.xlu0 %v977, 20
        %v1464 = vpop.permute.xlu0 %1463
        %1465 = vrot.lane.b32.xlu0 %v981, 20
        %v1466 = vpop.permute.xlu0 %1465
        %1467 = vrot.lane.b32.xlu0 %v984, 20
        %v1468 = vpop.permute.xlu0 %1467
        %1469 = vrot.lane.b32.xlu0 %v988, 20
        %v1470 = vpop.permute.xlu0 %1469
        %1471 = vrot.lane.b32.xlu0 %v991, 20
        %v1472 = vpop.permute.xlu0 %1471
        %1473 = vrot.lane.b32.xlu0 %v1409, 20
        %v1474 = vpop.permute.xlu0 %1473
        %1475 = vrot.lane.b32.xlu0 %v1412, 20
        %v1476 = vpop.permute.xlu0 %1475
        %vm1509 = vcmask 191648
        %1510 = vst.msk [vmem:[#allocation2] sm:$0xf] %vm1509, %v1414
        %1511 = vst.msk [vmem:[#allocation2 + $0x4] sm:$0xf] %vm1509, %v1416
        %1512 = vst.msk [vmem:[#allocation2 + $0x8] sm:$0xf] %vm1509, %v1418
        %1513 = vst.msk [vmem:[#allocation2 + $0xc] sm:$0xf] %vm1509, %v1420
        %1514 = vst.msk [vmem:[#allocation2 + $0x10] sm:$0xf] %vm1509, %v1422
        %1515 = vst.msk [vmem:[#allocation2 + $0x14] sm:$0xf] %vm1509, %v1424
        %1516 = vst.msk [vmem:[#allocation2 + $0x18] sm:$0xf] %vm1509, %v1426
        %1517 = vst.msk [vmem:[#allocation2 + $0x1c] sm:$0xf] %vm1509, %v1428
        %1518 = vst.msk [vmem:[#allocation2 + $0x20] sm:$0xf] %vm1509, %v1430
        %1519 = vst.msk [vmem:[#allocation2 + $0x24] sm:$0xf] %vm1509, %v1432
        %1520 = vst.msk [vmem:[#allocation2 + $0x28] sm:$0xf] %vm1509, %v1434
        %1521 = vst.msk [vmem:[#allocation2 + $0x2c] sm:$0xf] %vm1509, %v1436
        %1522 = vst.msk [vmem:[#allocation2 + $0x30] sm:$0xf] %vm1509, %v1438
        %1523 = vst.msk [vmem:[#allocation2 + $0x34] sm:$0xf] %vm1509, %v1440
        %1524 = vst.msk [vmem:[#allocation2 + $0x38] sm:$0xf] %vm1509, %v1442
        %1525 = vst.msk [vmem:[#allocation2 + $0x3c] sm:$0xf] %vm1509, %v1444
        %1526 = vst.msk [vmem:[#allocation2 + $0x40] sm:$0xf] %vm1509, %v1446
        %1527 = vst.msk [vmem:[#allocation2 + $0x44] sm:$0xf] %vm1509, %v1448
        %1528 = vst.msk [vmem:[#allocation2 + $0x48] sm:$0xf] %vm1509, %v1450
        %1529 = vst.msk [vmem:[#allocation2 + $0x4c] sm:$0xf] %vm1509, %v1452
        %1530 = vst.msk [vmem:[#allocation2 + $0x50] sm:$0xf] %vm1509, %v1454
        %1531 = vst.msk [vmem:[#allocation2 + $0x54] sm:$0xf] %vm1509, %v1456
        %1532 = vst.msk [vmem:[#allocation2 + $0x58] sm:$0xf] %vm1509, %v1458
        %1533 = vst.msk [vmem:[#allocation2 + $0x5c] sm:$0xf] %vm1509, %v1460
        %1534 = vst.msk [vmem:[#allocation2 + $0x60] sm:$0xf] %vm1509, %v1462
        %1535 = vst.msk [vmem:[#allocation2 + $0x64] sm:$0xf] %vm1509, %v1464
        %1536 = vst.msk [vmem:[#allocation2 + $0x68] sm:$0xf] %vm1509, %v1466
        %1537 = vst.msk [vmem:[#allocation2 + $0x6c] sm:$0xf] %vm1509, %v1468
        %1538 = vst.msk [vmem:[#allocation2 + $0x70] sm:$0xf] %vm1509, %v1470
        %1539 = vst.msk [vmem:[#allocation2 + $0x74] sm:$0xf] %vm1509, %v1472
        %1540 = vst.msk [vmem:[#allocation2 + $0x78] sm:$0xf] %vm1509, %v1474
        %1541 = vst.msk [vmem:[#allocation2 + $0x7c] sm:$0xf] %vm1509, %v1476
        %1544 = vrot.lane.b32.xlu0 %v232, 24
        %v1545 = vpop.permute.xlu0 %1544
        %1546 = vrot.lane.b32.xlu0 %v233, 24
        %v1547 = vpop.permute.xlu0 %1546
        %1548 = vrot.lane.b32.xlu0 %v235, 24
        %v1549 = vpop.permute.xlu0 %1548
        %1550 = vrot.lane.b32.xlu0 %v236, 24
        %v1551 = vpop.permute.xlu0 %1550
        %1552 = vrot.lane.b32.xlu0 %v238, 24
        %v1553 = vpop.permute.xlu0 %1552
        %1554 = vrot.lane.b32.xlu0 %v239, 24
        %v1555 = vpop.permute.xlu0 %1554
        %1556 = vrot.lane.b32.xlu0 %v241, 24
        %v1557 = vpop.permute.xlu0 %1556
        %1558 = vrot.lane.b32.xlu0 %v242, 24
        %v1559 = vpop.permute.xlu0 %1558
        %1560 = vrot.lane.b32.xlu0 %v244, 24
        %v1561 = vpop.permute.xlu0 %1560
        %1562 = vrot.lane.b32.xlu0 %v245, 24
        %v1563 = vpop.permute.xlu0 %1562
        %1564 = vrot.lane.b32.xlu0 %v247, 24
        %v1565 = vpop.permute.xlu0 %1564
        %1566 = vrot.lane.b32.xlu0 %v248, 24
        %v1567 = vpop.permute.xlu0 %1566
        %1568 = vrot.lane.b32.xlu0 %v250, 24
        %v1569 = vpop.permute.xlu0 %1568
        %1570 = vrot.lane.b32.xlu0 %v251, 24
        %v1571 = vpop.permute.xlu0 %1570
        %1572 = vrot.lane.b32.xlu0 %v253, 24
        %v1573 = vpop.permute.xlu0 %1572
        %1574 = vrot.lane.b32.xlu0 %v254, 24
        %v1575 = vpop.permute.xlu0 %1574
        %1576 = vrot.lane.b32.xlu0 %v256, 24
        %v1577 = vpop.permute.xlu0 %1576
        %1578 = vrot.lane.b32.xlu0 %v257, 24
        %v1579 = vpop.permute.xlu0 %1578
        %1580 = vrot.lane.b32.xlu0 %v259, 24
        %v1581 = vpop.permute.xlu0 %1580
        %1582 = vrot.lane.b32.xlu0 %v260, 24
        %v1583 = vpop.permute.xlu0 %1582
        %1584 = vrot.lane.b32.xlu0 %v262, 24
        %v1585 = vpop.permute.xlu0 %1584
        %1586 = vrot.lane.b32.xlu0 %v263, 24
        %v1587 = vpop.permute.xlu0 %1586
        %1588 = vrot.lane.b32.xlu0 %v265, 24
        %v1589 = vpop.permute.xlu0 %1588
        %1590 = vrot.lane.b32.xlu0 %v266, 24
        %v1591 = vpop.permute.xlu0 %1590
        %1592 = vrot.lane.b32.xlu0 %v268, 24
        %v1593 = vpop.permute.xlu0 %1592
        %1594 = vrot.lane.b32.xlu0 %v269, 24
        %v1595 = vpop.permute.xlu0 %1594
        %1596 = vrot.lane.b32.xlu0 %v271, 24
        %v1597 = vpop.permute.xlu0 %1596
        %1598 = vrot.lane.b32.xlu0 %v272, 24
        %v1599 = vpop.permute.xlu0 %1598
        %1600 = vrot.lane.b32.xlu0 %v274, 24
        %v1601 = vpop.permute.xlu0 %1600
        %1602 = vrot.lane.b32.xlu0 %v275, 24
        %v1603 = vpop.permute.xlu0 %1602
        %1604 = vrot.lane.b32.xlu0 %v277, 24
        %v1605 = vpop.permute.xlu0 %1604
        %1606 = vrot.lane.b32.xlu0 %v278, 24
        %v1607 = vpop.permute.xlu0 %1606
        %vm1640 = vcmask 224448
        %1641 = vst.msk [vmem:[#allocation2] sm:$0xf] %vm1640, %v1545
        %1642 = vst.msk [vmem:[#allocation2 + $0x4] sm:$0xf] %vm1640, %v1547
        %1643 = vst.msk [vmem:[#allocation2 + $0x8] sm:$0xf] %vm1640, %v1549
        %1644 = vst.msk [vmem:[#allocation2 + $0xc] sm:$0xf] %vm1640, %v1551
        %1645 = vst.msk [vmem:[#allocation2 + $0x10] sm:$0xf] %vm1640, %v1553
        %1646 = vst.msk [vmem:[#allocation2 + $0x14] sm:$0xf] %vm1640, %v1555
        %1647 = vst.msk [vmem:[#allocation2 + $0x18] sm:$0xf] %vm1640, %v1557
        %1648 = vst.msk [vmem:[#allocation2 + $0x1c] sm:$0xf] %vm1640, %v1559
        %1649 = vst.msk [vmem:[#allocation2 + $0x20] sm:$0xf] %vm1640, %v1561
        %1650 = vst.msk [vmem:[#allocation2 + $0x24] sm:$0xf] %vm1640, %v1563
        %1651 = vst.msk [vmem:[#allocation2 + $0x28] sm:$0xf] %vm1640, %v1565
        %1652 = vst.msk [vmem:[#allocation2 + $0x2c] sm:$0xf] %vm1640, %v1567
        %1653 = vst.msk [vmem:[#allocation2 + $0x30] sm:$0xf] %vm1640, %v1569
        %1654 = vst.msk [vmem:[#allocation2 + $0x34] sm:$0xf] %vm1640, %v1571
        %1655 = vst.msk [vmem:[#allocation2 + $0x38] sm:$0xf] %vm1640, %v1573
        %1656 = vst.msk [vmem:[#allocation2 + $0x3c] sm:$0xf] %vm1640, %v1575
        %1657 = vst.msk [vmem:[#allocation2 + $0x40] sm:$0xf] %vm1640, %v1577
        %1658 = vst.msk [vmem:[#allocation2 + $0x44] sm:$0xf] %vm1640, %v1579
        %1659 = vst.msk [vmem:[#allocation2 + $0x48] sm:$0xf] %vm1640, %v1581
        %1660 = vst.msk [vmem:[#allocation2 + $0x4c] sm:$0xf] %vm1640, %v1583
        %1661 = vst.msk [vmem:[#allocation2 + $0x50] sm:$0xf] %vm1640, %v1585
        %1662 = vst.msk [vmem:[#allocation2 + $0x54] sm:$0xf] %vm1640, %v1587
        %1663 = vst.msk [vmem:[#allocation2 + $0x58] sm:$0xf] %vm1640, %v1589
        %1664 = vst.msk [vmem:[#allocation2 + $0x5c] sm:$0xf] %vm1640, %v1591
        %1665 = vst.msk [vmem:[#allocation2 + $0x60] sm:$0xf] %vm1640, %v1593
        %1666 = vst.msk [vmem:[#allocation2 + $0x64] sm:$0xf] %vm1640, %v1595
        %1667 = vst.msk [vmem:[#allocation2 + $0x68] sm:$0xf] %vm1640, %v1597
        %1668 = vst.msk [vmem:[#allocation2 + $0x6c] sm:$0xf] %vm1640, %v1599
        %1669 = vst.msk [vmem:[#allocation2 + $0x70] sm:$0xf] %vm1640, %v1601
        %1670 = vst.msk [vmem:[#allocation2 + $0x74] sm:$0xf] %vm1640, %v1603
        %1671 = vst.msk [vmem:[#allocation2 + $0x78] sm:$0xf] %vm1640, %v1605
        %1672 = vst.msk [vmem:[#allocation2 + $0x7c] sm:$0xf] %vm1640, %v1607
        %v1674 = vshrl.u32 %v277, 16
        %v1676 = vrot.slane %v1674, 4
        %v1677 = vshll.u32 %v277, 16
        %v1679 = vrot.slane %v1677, 5
        %v1680 = vor.u32 %v1676, %v1679
        %v1681 = vrot.slane %v1680, 4
        %v1683 = vshll.u32 %v278, 16
        %v1685 = vrot.slane %v1683, 5
        %v1686 = vsel %vm315, %v1681, %v1685
        %v1687 = vshrl.u32 %v278, 16
        %v1689 = vrot.slane %v1687, 4
        %v1690 = vor.u32 %v1689, %v1685
        %v1691 = vrot.slane %v1690, 4
        %v1693 = vshll.u32 %v279, 16
        %v1695 = vrot.slane %v1693, 5
        %v1696 = vsel %vm315, %v1691, %v1695
        %1697 = vrot.lane.b32.xlu0 %v377, 28
        %v1698 = vpop.permute.xlu0 %1697
        %1699 = vrot.lane.b32.xlu0 %v387, 28
        %v1700 = vpop.permute.xlu0 %1699
        %1701 = vrot.lane.b32.xlu0 %v401, 28
        %v1702 = vpop.permute.xlu0 %1701
        %1703 = vrot.lane.b32.xlu0 %v411, 28
        %v1704 = vpop.permute.xlu0 %1703
        %1705 = vrot.lane.b32.xlu0 %v425, 28
        %v1706 = vpop.permute.xlu0 %1705
        %1707 = vrot.lane.b32.xlu0 %v435, 28
        %v1708 = vpop.permute.xlu0 %1707
        %1709 = vrot.lane.b32.xlu0 %v449, 28
        %v1710 = vpop.permute.xlu0 %1709
        %1711 = vrot.lane.b32.xlu0 %v459, 28
        %v1712 = vpop.permute.xlu0 %1711
        %1713 = vrot.lane.b32.xlu0 %v473, 28
        %v1714 = vpop.permute.xlu0 %1713
        %1715 = vrot.lane.b32.xlu0 %v483, 28
        %v1716 = vpop.permute.xlu0 %1715
        %1717 = vrot.lane.b32.xlu0 %v497, 28
        %v1718 = vpop.permute.xlu0 %1717
        %1719 = vrot.lane.b32.xlu0 %v507, 28
        %v1720 = vpop.permute.xlu0 %1719
        %1721 = vrot.lane.b32.xlu0 %v521, 28
        %v1722 = vpop.permute.xlu0 %1721
        %1723 = vrot.lane.b32.xlu0 %v531, 28
        %v1724 = vpop.permute.xlu0 %1723
        %1725 = vrot.lane.b32.xlu0 %v545, 28
        %v1726 = vpop.permute.xlu0 %1725
        %1727 = vrot.lane.b32.xlu0 %v555, 28
        %v1728 = vpop.permute.xlu0 %1727
        %1729 = vrot.lane.b32.xlu0 %v569, 28
        %v1730 = vpop.permute.xlu0 %1729
        %1731 = vrot.lane.b32.xlu0 %v579, 28
        %v1732 = vpop.permute.xlu0 %1731
        %1733 = vrot.lane.b32.xlu0 %v593, 28
        %v1734 = vpop.permute.xlu0 %1733
        %1735 = vrot.lane.b32.xlu0 %v603, 28
        %v1736 = vpop.permute.xlu0 %1735
        %1737 = vrot.lane.b32.xlu0 %v617, 28
        %v1738 = vpop.permute.xlu0 %1737
        %1739 = vrot.lane.b32.xlu0 %v627, 28
        %v1740 = vpop.permute.xlu0 %1739
        %1741 = vrot.lane.b32.xlu0 %v641, 28
        %v1742 = vpop.permute.xlu0 %1741
        %1743 = vrot.lane.b32.xlu0 %v651, 28
        %v1744 = vpop.permute.xlu0 %1743
        %1745 = vrot.lane.b32.xlu0 %v665, 28
        %v1746 = vpop.permute.xlu0 %1745
        %1747 = vrot.lane.b32.xlu0 %v675, 28
        %v1748 = vpop.permute.xlu0 %1747
        %1749 = vrot.lane.b32.xlu0 %v689, 28
        %v1750 = vpop.permute.xlu0 %1749
        %1751 = vrot.lane.b32.xlu0 %v699, 28
        %v1752 = vpop.permute.xlu0 %1751
        %1753 = vrot.lane.b32.xlu0 %v1265, 28
        %v1754 = vpop.permute.xlu0 %1753
        %1755 = vrot.lane.b32.xlu0 %v1275, 28
        %v1756 = vpop.permute.xlu0 %1755
        %1757 = vrot.lane.b32.xlu0 %v1686, 28
        %v1758 = vpop.permute.xlu0 %1757
        %1759 = vrot.lane.b32.xlu0 %v1696, 28
        %v1760 = vpop.permute.xlu0 %1759
        %vm1793 = vcmask 257248
        %1794 = vst.msk [vmem:[#allocation2] sm:$0xf] %vm1793, %v1698
        %1795 = vst.msk [vmem:[#allocation2 + $0x4] sm:$0xf] %vm1793, %v1700
        %1796 = vst.msk [vmem:[#allocation2 + $0x8] sm:$0xf] %vm1793, %v1702
        %1797 = vst.msk [vmem:[#allocation2 + $0xc] sm:$0xf] %vm1793, %v1704
        %1798 = vst.msk [vmem:[#allocation2 + $0x10] sm:$0xf] %vm1793, %v1706
        %1799 = vst.msk [vmem:[#allocation2 + $0x14] sm:$0xf] %vm1793, %v1708
        %1800 = vst.msk [vmem:[#allocation2 + $0x18] sm:$0xf] %vm1793, %v1710
        %1801 = vst.msk [vmem:[#allocation2 + $0x1c] sm:$0xf] %vm1793, %v1712
        %1802 = vst.msk [vmem:[#allocation2 + $0x20] sm:$0xf] %vm1793, %v1714
        %1803 = vst.msk [vmem:[#allocation2 + $0x24] sm:$0xf] %vm1793, %v1716
        %1804 = vst.msk [vmem:[#allocation2 + $0x28] sm:$0xf] %vm1793, %v1718
        %1805 = vst.msk [vmem:[#allocation2 + $0x2c] sm:$0xf] %vm1793, %v1720
        %1806 = vst.msk [vmem:[#allocation2 + $0x30] sm:$0xf] %vm1793, %v1722
        %1807 = vst.msk [vmem:[#allocation2 + $0x34] sm:$0xf] %vm1793, %v1724
        %1808 = vst.msk [vmem:[#allocation2 + $0x38] sm:$0xf] %vm1793, %v1726
        %1809 = vst.msk [vmem:[#allocation2 + $0x3c] sm:$0xf] %vm1793, %v1728
        %1810 = vst.msk [vmem:[#allocation2 + $0x40] sm:$0xf] %vm1793, %v1730
        %1811 = vst.msk [vmem:[#allocation2 + $0x44] sm:$0xf] %vm1793, %v1732
        %1812 = vst.msk [vmem:[#allocation2 + $0x48] sm:$0xf] %vm1793, %v1734
        %1813 = vst.msk [vmem:[#allocation2 + $0x4c] sm:$0xf] %vm1793, %v1736
        %1814 = vst.msk [vmem:[#allocation2 + $0x50] sm:$0xf] %vm1793, %v1738
        %1815 = vst.msk [vmem:[#allocation2 + $0x54] sm:$0xf] %vm1793, %v1740
        %1816 = vst.msk [vmem:[#allocation2 + $0x58] sm:$0xf] %vm1793, %v1742
        %1817 = vst.msk [vmem:[#allocation2 + $0x5c] sm:$0xf] %vm1793, %v1744
        %1818 = vst.msk [vmem:[#allocation2 + $0x60] sm:$0xf] %vm1793, %v1746
        %1819 = vst.msk [vmem:[#allocation2 + $0x64] sm:$0xf] %vm1793, %v1748
        %1820 = vst.msk [vmem:[#allocation2 + $0x68] sm:$0xf] %vm1793, %v1750
        %1821 = vst.msk [vmem:[#allocation2 + $0x6c] sm:$0xf] %vm1793, %v1752
        %1822 = vst.msk [vmem:[#allocation2 + $0x70] sm:$0xf] %vm1793, %v1754
        %1823 = vst.msk [vmem:[#allocation2 + $0x74] sm:$0xf] %vm1793, %v1756
        %1824 = vst.msk [vmem:[#allocation2 + $0x78] sm:$0xf] %vm1793, %v1758
        %1825 = vst.msk [vmem:[#allocation2 + $0x7c] sm:$0xf] %vm1793, %v1760
        %v1827 = vrot.slane %v277, 5
        %v1828 = vrot.slane %v1827, 4
        %v1829 = vrot.slane %v278, 5
        %v1830 = vsel %vm879, %v1828, %v1829
        %v1831 = vrot.slane %v1829, 4
        %v1832 = vrot.slane %v279, 5
        %v1833 = vsel %vm879, %v1831, %v1832
        %1834 = vrot.lane.b32.xlu0 %v897, 32
        %v1835 = vpop.permute.xlu0 %1834
        %1836 = vrot.lane.b32.xlu0 %v900, 32
        %v1837 = vpop.permute.xlu0 %1836
        %1838 = vrot.lane.b32.xlu0 %v904, 32
        %v1839 = vpop.permute.xlu0 %1838
        %1840 = vrot.lane.b32.xlu0 %v907, 32
        %v1841 = vpop.permute.xlu0 %1840
        %1842 = vrot.lane.b32.xlu0 %v911, 32
        %v1843 = vpop.permute.xlu0 %1842
        %1844 = vrot.lane.b32.xlu0 %v914, 32
        %v1845 = vpop.permute.xlu0 %1844
        %1846 = vrot.lane.b32.xlu0 %v918, 32
        %v1847 = vpop.permute.xlu0 %1846
        %1848 = vrot.lane.b32.xlu0 %v921, 32
        %v1849 = vpop.permute.xlu0 %1848
        %1850 = vrot.lane.b32.xlu0 %v925, 32
        %v1851 = vpop.permute.xlu0 %1850
        %1852 = vrot.lane.b32.xlu0 %v928, 32
        %v1853 = vpop.permute.xlu0 %1852
        %1854 = vrot.lane.b32.xlu0 %v932, 32
        %v1855 = vpop.permute.xlu0 %1854
        %1856 = vrot.lane.b32.xlu0 %v935, 32
        %v1857 = vpop.permute.xlu0 %1856
        %1858 = vrot.lane.b32.xlu0 %v939, 32
        %v1859 = vpop.permute.xlu0 %1858
        %1860 = vrot.lane.b32.xlu0 %v942, 32
        %v1861 = vpop.permute.xlu0 %1860
        %1862 = vrot.lane.b32.xlu0 %v946, 32
        %v1863 = vpop.permute.xlu0 %1862
        %1864 = vrot.lane.b32.xlu0 %v949, 32
        %v1865 = vpop.permute.xlu0 %1864
        %1866 = vrot.lane.b32.xlu0 %v953, 32
        %v1867 = vpop.permute.xlu0 %1866
        %1868 = vrot.lane.b32.xlu0 %v956, 32
        %v1869 = vpop.permute.xlu0 %1868
        %1870 = vrot.lane.b32.xlu0 %v960, 32
        %v1871 = vpop.permute.xlu0 %1870
        %1872 = vrot.lane.b32.xlu0 %v963, 32
        %v1873 = vpop.permute.xlu0 %1872
        %1874 = vrot.lane.b32.xlu0 %v967, 32
        %v1875 = vpop.permute.xlu0 %1874
        %1876 = vrot.lane.b32.xlu0 %v970, 32
        %v1877 = vpop.permute.xlu0 %1876
        %1878 = vrot.lane.b32.xlu0 %v974, 32
        %v1879 = vpop.permute.xlu0 %1878
        %1880 = vrot.lane.b32.xlu0 %v977, 32
        %v1881 = vpop.permute.xlu0 %1880
        %1882 = vrot.lane.b32.xlu0 %v981, 32
        %v1883 = vpop.permute.xlu0 %1882
        %1884 = vrot.lane.b32.xlu0 %v984, 32
        %v1885 = vpop.permute.xlu0 %1884
        %1886 = vrot.lane.b32.xlu0 %v988, 32
        %v1887 = vpop.permute.xlu0 %1886
        %1888 = vrot.lane.b32.xlu0 %v991, 32
        %v1889 = vpop.permute.xlu0 %1888
        %1890 = vrot.lane.b32.xlu0 %v1409, 32
        %v1891 = vpop.permute.xlu0 %1890
        %1892 = vrot.lane.b32.xlu0 %v1412, 32
        %v1893 = vpop.permute.xlu0 %1892
        %1894 = vrot.lane.b32.xlu0 %v1830, 32
        %v1895 = vpop.permute.xlu0 %1894
        %1896 = vrot.lane.b32.xlu0 %v1833, 32
        %v1897 = vpop.permute.xlu0 %1896
        %vm1930 = vcmask 290048
        %1931 = vst.msk [vmem:[#allocation2] sm:$0xf] %vm1930, %v1835
        %1932 = vst.msk [vmem:[#allocation2 + $0x4] sm:$0xf] %vm1930, %v1837
        %1933 = vst.msk [vmem:[#allocation2 + $0x8] sm:$0xf] %vm1930, %v1839
        %1934 = vst.msk [vmem:[#allocation2 + $0xc] sm:$0xf] %vm1930, %v1841
        %1935 = vst.msk [vmem:[#allocation2 + $0x10] sm:$0xf] %vm1930, %v1843
        %1936 = vst.msk [vmem:[#allocation2 + $0x14] sm:$0xf] %vm1930, %v1845
        %1937 = vst.msk [vmem:[#allocation2 + $0x18] sm:$0xf] %vm1930, %v1847
        %1938 = vst.msk [vmem:[#allocation2 + $0x1c] sm:$0xf] %vm1930, %v1849
        %1939 = vst.msk [vmem:[#allocation2 + $0x20] sm:$0xf] %vm1930, %v1851
        %1940 = vst.msk [vmem:[#allocation2 + $0x24] sm:$0xf] %vm1930, %v1853
        %1941 = vst.msk [vmem:[#allocation2 + $0x28] sm:$0xf] %vm1930, %v1855
        %1942 = vst.msk [vmem:[#allocation2 + $0x2c] sm:$0xf] %vm1930, %v1857
        %1943 = vst.msk [vmem:[#allocation2 + $0x30] sm:$0xf] %vm1930, %v1859
        %1944 = vst.msk [vmem:[#allocation2 + $0x34] sm:$0xf] %vm1930, %v1861
        %1945 = vst.msk [vmem:[#allocation2 + $0x38] sm:$0xf] %vm1930, %v1863
        %1946 = vst.msk [vmem:[#allocation2 + $0x3c] sm:$0xf] %vm1930, %v1865
        %1947 = vst.msk [vmem:[#allocation2 + $0x40] sm:$0xf] %vm1930, %v1867
        %1948 = vst.msk [vmem:[#allocation2 + $0x44] sm:$0xf] %vm1930, %v1869
        %1949 = vst.msk [vmem:[#allocation2 + $0x48] sm:$0xf] %vm1930, %v1871
        %1950 = vst.msk [vmem:[#allocation2 + $0x4c] sm:$0xf] %vm1930, %v1873
        %1951 = vst.msk [vmem:[#allocation2 + $0x50] sm:$0xf] %vm1930, %v1875
        %1952 = vst.msk [vmem:[#allocation2 + $0x54] sm:$0xf] %vm1930, %v1877
        %1953 = vst.msk [vmem:[#allocation2 + $0x58] sm:$0xf] %vm1930, %v1879
        %1954 = vst.msk [vmem:[#allocation2 + $0x5c] sm:$0xf] %vm1930, %v1881
        %1955 = vst.msk [vmem:[#allocation2 + $0x60] sm:$0xf] %vm1930, %v1883
        %1956 = vst.msk [vmem:[#allocation2 + $0x64] sm:$0xf] %vm1930, %v1885
        %1957 = vst.msk [vmem:[#allocation2 + $0x68] sm:$0xf] %vm1930, %v1887
        %1958 = vst.msk [vmem:[#allocation2 + $0x6c] sm:$0xf] %vm1930, %v1889
        %1959 = vst.msk [vmem:[#allocation2 + $0x70] sm:$0xf] %vm1930, %v1891
        %1960 = vst.msk [vmem:[#allocation2 + $0x74] sm:$0xf] %vm1930, %v1893
        %1961 = vst.msk [vmem:[#allocation2 + $0x78] sm:$0xf] %vm1930, %v1895
        %1962 = vst.msk [vmem:[#allocation2 + $0x7c] sm:$0xf] %vm1930, %v1897
        %v1963 = vld [vmem:[#allocation2] sm:$0xf]
        %v1964 = vld [vmem:[#allocation2 + $0x4] sm:$0xf]
        %v1965 = vld [vmem:[#allocation2 + $0x8] sm:$0xf]
        %v1966 = vld [vmem:[#allocation2 + $0xc] sm:$0xf]
        %v1967 = vld [vmem:[#allocation2 + $0x10] sm:$0xf]
        %v1968 = vld [vmem:[#allocation2 + $0x14] sm:$0xf]
        %v1969 = vld [vmem:[#allocation2 + $0x18] sm:$0xf]
        %v1970 = vld [vmem:[#allocation2 + $0x1c] sm:$0xf]
        %v1971 = vld [vmem:[#allocation2 + $0x20] sm:$0xf]
        %v1972 = vld [vmem:[#allocation2 + $0x24] sm:$0xf]
        %v1973 = vld [vmem:[#allocation2 + $0x28] sm:$0xf]
        %v1974 = vld [vmem:[#allocation2 + $0x2c] sm:$0xf]
        %v1975 = vld [vmem:[#allocation2 + $0x30] sm:$0xf]
        %v1976 = vld [vmem:[#allocation2 + $0x34] sm:$0xf]
        %v1977 = vld [vmem:[#allocation2 + $0x38] sm:$0xf]
        %v1978 = vld [vmem:[#allocation2 + $0x3c] sm:$0xf]
        %v1979 = vld [vmem:[#allocation2 + $0x40] sm:$0xf]
        %v1980 = vld [vmem:[#allocation2 + $0x44] sm:$0xf]
        %v1981 = vld [vmem:[#allocation2 + $0x48] sm:$0xf]
        %v1982 = vld [vmem:[#allocation2 + $0x4c] sm:$0xf]
        %v1983 = vld [vmem:[#allocation2 + $0x50] sm:$0xf]
        %v1984 = vld [vmem:[#allocation2 + $0x54] sm:$0xf]
        %v1985 = vld [vmem:[#allocation2 + $0x58] sm:$0xf]
        %v1986 = vld [vmem:[#allocation2 + $0x5c] sm:$0xf]
        %v1987 = vld [vmem:[#allocation2 + $0x60] sm:$0xf]
        %v1988 = vld [vmem:[#allocation2 + $0x64] sm:$0xf]
        %v1989 = vld [vmem:[#allocation2 + $0x68] sm:$0xf]
        %v1990 = vld [vmem:[#allocation2 + $0x6c] sm:$0xf]
        %v1991 = vld [vmem:[#allocation2 + $0x70] sm:$0xf]
        %v1992 = vld [vmem:[#allocation2 + $0x74] sm:$0xf]
        %v1993 = vld [vmem:[#allocation2 + $0x78] sm:$0xf]
        %v1994 = vld [vmem:[#allocation2 + $0x7c] sm:$0xf]
        %v1995 = vld [vmem:[%s1] sm:$0xf]
        %v1996 = vld [vmem:[%s1 + $0x4] sm:$0xf]
        %v1997 = vld [vmem:[%s1 + $0x8] sm:$0xf]
        %v1998 = vld [vmem:[%s1 + $0xc] sm:$0xf]
        %v1999 = vld [vmem:[%s1 + $0x10] sm:$0x3]
        %v2000 = vld [vmem:[%s2] sm:$0x1]
        %v2002 = vperm.slane %v2000, 0
        %v2036 = vunpack.c.l.b16 %v1963
        %v2037 = vunpack.c.l.b16 %v1964
        %v2038 = vunpack.c.l.b16 %v1965
        %v2039 = vunpack.c.l.b16 %v1966
        %v2040 = vunpack.c.l.b16 %v1967
        %v2041 = vunpack.c.l.b16 %v1968
        %v2042 = vunpack.c.l.b16 %v1969
        %v2043 = vunpack.c.l.b16 %v1970
        %v2044 = vunpack.c.l.b16 %v1971
        %v2045 = vunpack.c.l.b16 %v1972
        %v2046 = vunpack.c.l.b16 %v1973
        %v2047 = vunpack.c.l.b16 %v1974
        %v2048 = vunpack.c.l.b16 %v1975
        %v2049 = vunpack.c.l.b16 %v1976
        %v2050 = vunpack.c.l.b16 %v1977
        %v2051 = vunpack.c.l.b16 %v1978
        %v2052 = vunpack.c.l.b16 %v1979
        %v2053 = vunpack.c.l.b16 %v1980
        %v2054 = vunpack.c.l.b16 %v1981
        %v2055 = vunpack.c.l.b16 %v1982
        %v2056 = vunpack.c.l.b16 %v1983
        %v2057 = vunpack.c.l.b16 %v1984
        %v2058 = vunpack.c.l.b16 %v1985
        %v2059 = vunpack.c.l.b16 %v1986
        %v2060 = vunpack.c.l.b16 %v1987
        %v2061 = vunpack.c.l.b16 %v1988
        %v2062 = vunpack.c.l.b16 %v1989
        %v2063 = vunpack.c.l.b16 %v1990
        %v2064 = vunpack.c.l.b16 %v1991
        %v2065 = vunpack.c.l.b16 %v1992
        %v2066 = vunpack.c.l.b16 %v1993
        %v2067 = vunpack.c.l.b16 %v1994
        %v2068 = vpack.c.b16 %v2037, %v2036
        %v2069 = vpack.c.b16 %v2039, %v2038
        %v2070 = vpack.c.b16 %v2041, %v2040
        %v2071 = vpack.c.b16 %v2043, %v2042
        %v2072 = vpack.c.b16 %v2045, %v2044
        %v2073 = vpack.c.b16 %v2047, %v2046
        %v2074 = vpack.c.b16 %v2049, %v2048
        %v2075 = vpack.c.b16 %v2051, %v2050
        %v2076 = vpack.c.b16 %v2053, %v2052
        %v2077 = vpack.c.b16 %v2055, %v2054
        %v2078 = vpack.c.b16 %v2057, %v2056
        %v2079 = vpack.c.b16 %v2059, %v2058
        %v2080 = vpack.c.b16 %v2061, %v2060
        %v2081 = vpack.c.b16 %v2063, %v2062
        %v2082 = vpack.c.b16 %v2065, %v2064
        %v2083 = vpack.c.b16 %v2067, %v2066
        %v2089 = vunpack.c.l.b16 %v1995
        %v2090 = vunpack.c.l.b16 %v1996
        %v2091 = vunpack.c.l.b16 %v1997
        %v2092 = vunpack.c.l.b16 %v1998
        %v2093 = vunpack.c.l.b16 %v1999
        %v2094 = vpack.c.b16 %v2090, %v2089
        %v2095 = vpack.c.b16 %v2092, %v2091
        %v2096 = vpack.c.b16 %v2093, %v2093
        %vm2099 = vcmask 293888
        %v2101 = vsel %vm2099, %v2068, 0
        %v2104 = vsel %vm2099, %v2069, 0
        %v2107 = vsel %vm2099, %v2070, 0
        %v2110 = vsel %vm2099, %v2071, 0
        %v2113 = vsel %vm2099, %v2072, 0
        %v2116 = vsel %vm2099, %v2073, 0
        %v2119 = vsel %vm2099, %v2074, 0
        %v2122 = vsel %vm2099, %v2075, 0
        %v2125 = vsel %vm2099, %v2076, 0
        %v2128 = vsel %vm2099, %v2077, 0
        %v2131 = vsel %vm2099, %v2078, 0
        %v2134 = vsel %vm2099, %v2079, 0
        %v2137 = vsel %vm2099, %v2080, 0
        %v2140 = vsel %vm2099, %v2081, 0
        %v2143 = vsel %vm2099, %v2082, 0
        %v2146 = vsel %vm2099, %v2083, 0
        %vm2148 = vcmask 1041408
        %v2150 = vsel %vm2148, %v2096, 0
        %2152 = vmatpush.bf16.msra.mxu0 0
        %2153 = vmatpush.bf16.msra.mxu0 0
        %2154 = vmatpush.bf16.msra.mxu0 0
        %2155 = vmatpush.bf16.msra.mxu0 0
        %2156 = vmatpush.bf16.msra.mxu0 0
        %2157 = vmatpush.bf16.msra.mxu0 %v2150
        %2158 = vmatpush.bf16.msra.mxu0 %v2095
        %2159 = vmatpush.bf16.msra.mxu0 %v2094
        %2160 = vmatmul.bf16.gmra.mxu0 %v2101
        %v2161 = vpop.f32.mrf.mxu0
        %v2162 = vadd.f32 %v2002, %v2161
        %v2163 = vpop.f32.mrf.mxu0
        %v2164 = vadd.f32 %v2002, %v2163
        %2165 = vmatmul.bf16.gmra.mxu0 %v2104
        %v2166 = vpop.f32.mrf.mxu0
        %v2167 = vadd.f32 %v2002, %v2166
        %v2168 = vpop.f32.mrf.mxu0
        %v2169 = vadd.f32 %v2002, %v2168
        %2170 = vmatmul.bf16.gmra.mxu0 %v2107
        %v2171 = vpop.f32.mrf.mxu0
        %v2172 = vadd.f32 %v2002, %v2171
        %v2173 = vpop.f32.mrf.mxu0
        %v2174 = vadd.f32 %v2002, %v2173
        %2175 = vmatmul.bf16.gmra.mxu0 %v2110
        %v2176 = vpop.f32.mrf.mxu0
        %v2177 = vadd.f32 %v2002, %v2176
        %v2178 = vpop.f32.mrf.mxu0
        %v2179 = vadd.f32 %v2002, %v2178
        %2180 = vmatmul.bf16.gmra.mxu0 %v2113
        %v2181 = vpop.f32.mrf.mxu0
        %v2182 = vadd.f32 %v2002, %v2181
        %v2183 = vpop.f32.mrf.mxu0
        %v2184 = vadd.f32 %v2002, %v2183
        %2185 = vmatmul.bf16.gmra.mxu0 %v2116
        %v2186 = vpop.f32.mrf.mxu0
        %v2187 = vadd.f32 %v2002, %v2186
        %v2188 = vpop.f32.mrf.mxu0
        %v2189 = vadd.f32 %v2002, %v2188
        %2190 = vmatmul.bf16.gmra.mxu0 %v2119
        %v2191 = vpop.f32.mrf.mxu0
        %v2192 = vadd.f32 %v2002, %v2191
        %v2193 = vpop.f32.mrf.mxu0
        %v2194 = vadd.f32 %v2002, %v2193
        %2195 = vmatmul.bf16.gmra.mxu0 %v2122
        %v2196 = vpop.f32.mrf.mxu0
        %v2197 = vadd.f32 %v2002, %v2196
        %v2198 = vpop.f32.mrf.mxu0
        %v2199 = vadd.f32 %v2002, %v2198
        %2200 = vmatmul.bf16.gmra.mxu0 %v2125
        %v2201 = vpop.f32.mrf.mxu0
        %v2202 = vadd.f32 %v2002, %v2201
        %v2203 = vpop.f32.mrf.mxu0
        %v2204 = vadd.f32 %v2002, %v2203
        %2205 = vmatmul.bf16.gmra.mxu0 %v2128
        %v2206 = vpop.f32.mrf.mxu0
        %v2207 = vadd.f32 %v2002, %v2206
        %v2208 = vpop.f32.mrf.mxu0
        %v2209 = vadd.f32 %v2002, %v2208
        %2210 = vmatmul.bf16.gmra.mxu0 %v2131
        %v2211 = vpop.f32.mrf.mxu0
        %v2212 = vadd.f32 %v2002, %v2211
        %v2213 = vpop.f32.mrf.mxu0
        %v2214 = vadd.f32 %v2002, %v2213
        %2215 = vmatmul.bf16.gmra.mxu0 %v2134
        %v2216 = vpop.f32.mrf.mxu0
        %v2217 = vadd.f32 %v2002, %v2216
        %v2218 = vpop.f32.mrf.mxu0
        %v2219 = vadd.f32 %v2002, %v2218
        %2220 = vmatmul.bf16.gmra.mxu0 %v2137
        %v2221 = vpop.f32.mrf.mxu0
        %v2222 = vadd.f32 %v2002, %v2221
        %v2223 = vpop.f32.mrf.mxu0
        %v2224 = vadd.f32 %v2002, %v2223
        %2225 = vmatmul.bf16.gmra.mxu0 %v2140
        %v2226 = vpop.f32.mrf.mxu0
        %v2227 = vadd.f32 %v2002, %v2226
        %v2228 = vpop.f32.mrf.mxu0
        %v2229 = vadd.f32 %v2002, %v2228
        %2230 = vmatmul.bf16.gmra.mxu0 %v2143
        %v2231 = vpop.f32.mrf.mxu0
        %v2232 = vadd.f32 %v2002, %v2231
        %v2233 = vpop.f32.mrf.mxu0
        %v2234 = vadd.f32 %v2002, %v2233
        %2235 = vmatmul.bf16.gmra.mxu0 %v2146
        %v2236 = vpop.f32.mrf.mxu0
        %v2237 = vadd.f32 %v2002, %v2236
        %v2238 = vpop.f32.mrf.mxu0
        %v2239 = vadd.f32 %v2002, %v2238
        %2240 = vdwg.mxu0
        %v2241 = vmax.f32 %v2162, 0.0
        %v2242 = vmax.f32 %v2164, 0.0
        %v2243 = vmax.f32 %v2167, 0.0
        %v2244 = vmax.f32 %v2169, 0.0
        %v2245 = vmax.f32 %v2172, 0.0
        %v2246 = vmax.f32 %v2174, 0.0
        %v2247 = vmax.f32 %v2177, 0.0
        %v2248 = vmax.f32 %v2179, 0.0
        %v2249 = vmax.f32 %v2182, 0.0
        %v2250 = vmax.f32 %v2184, 0.0
        %v2251 = vmax.f32 %v2187, 0.0
        %v2252 = vmax.f32 %v2189, 0.0
        %v2253 = vmax.f32 %v2192, 0.0
        %v2254 = vmax.f32 %v2194, 0.0
        %v2255 = vmax.f32 %v2197, 0.0
        %v2256 = vmax.f32 %v2199, 0.0
        %v2257 = vmax.f32 %v2202, 0.0
        %v2258 = vmax.f32 %v2204, 0.0
        %v2259 = vmax.f32 %v2207, 0.0
        %v2260 = vmax.f32 %v2209, 0.0
        %v2261 = vmax.f32 %v2212, 0.0
        %v2262 = vmax.f32 %v2214, 0.0
        %v2263 = vmax.f32 %v2217, 0.0
        %v2264 = vmax.f32 %v2219, 0.0
        %v2265 = vmax.f32 %v2222, 0.0
        %v2266 = vmax.f32 %v2224, 0.0
        %v2267 = vmax.f32 %v2227, 0.0
        %v2268 = vmax.f32 %v2229, 0.0
        %v2269 = vmax.f32 %v2232, 0.0
        %v2270 = vmax.f32 %v2234, 0.0
        %v2271 = vmax.f32 %v2237, 0.0
        %v2272 = vmax.f32 %v2239, 0.0
        %v2273 = vld [vmem:[%s3] sm:$0xf]
        %v2274 = vpack.c.bf16 %v2242, %v2241
        %v2275 = vpack.c.bf16 %v2244, %v2243
        %v2276 = vpack.c.bf16 %v2246, %v2245
        %v2277 = vpack.c.bf16 %v2248, %v2247
        %v2278 = vpack.c.bf16 %v2250, %v2249
        %v2279 = vpack.c.bf16 %v2252, %v2251
        %v2280 = vpack.c.bf16 %v2254, %v2253
        %v2281 = vpack.c.bf16 %v2256, %v2255
        %v2282 = vpack.c.bf16 %v2258, %v2257
        %v2283 = vpack.c.bf16 %v2260, %v2259
        %v2284 = vpack.c.bf16 %v2262, %v2261
        %v2285 = vpack.c.bf16 %v2264, %v2263
        %v2286 = vpack.c.bf16 %v2266, %v2265
        %v2287 = vpack.c.bf16 %v2268, %v2267
        %v2288 = vpack.c.bf16 %v2270, %v2269
        %v2289 = vpack.c.bf16 %v2272, %v2271
        %vm2290 = vcmask 261120
        %v2292 = vsel %vm2290, %v2273, 0
        %v2295 = vsel %vm2290, %v2274, 0
        %v2298 = vsel %vm2290, %v2275, 0
        %v2301 = vsel %vm2290, %v2276, 0
        %v2304 = vsel %vm2290, %v2277, 0
        %v2307 = vsel %vm2290, %v2278, 0
        %v2310 = vsel %vm2290, %v2279, 0
        %v2313 = vsel %vm2290, %v2280, 0
        %v2316 = vsel %vm2290, %v2281, 0
        %v2319 = vsel %vm2290, %v2282, 0
        %v2322 = vsel %vm2290, %v2283, 0
        %v2325 = vsel %vm2290, %v2284, 0
        %v2328 = vsel %vm2290, %v2285, 0
        %v2331 = vsel %vm2290, %v2286, 0
        %v2334 = vsel %vm2290, %v2287, 0
        %v2337 = vsel %vm2290, %v2288, 0
        %v2340 = vsel %vm2290, %v2289, 0
        %2342 = vmatpush.bf16.xpose.msra.mxu0 %v2316
        %2343 = vmatpush.bf16.xpose.msra.mxu0 %v2313
        %2344 = vmatpush.bf16.xpose.msra.mxu0 %v2310
        %2345 = vmatpush.bf16.xpose.msra.mxu0 %v2307
        %2346 = vmatpush.bf16.xpose.msra.mxu0 %v2304
        %2347 = vmatpush.bf16.xpose.msra.mxu0 %v2301
        %2348 = vmatpush.bf16.xpose.msra.mxu0 %v2298
        %2349 = vmatpush.bf16.xpose.msra.mxu0 %v2295
        %2350 = vmatmul.bf16.gmra.mxu0 %v2292
        %v2351 = vpop.f32.mrf.mxu0
        %v2352 = vadd.f32 0.0, %v2351
        %v2353 = vpop.f32.mrf.mxu0
        %2354 = vdwg.mxu0
        %2355 = vmatpush.bf16.xpose.msra.mxu0 %v2340
        %2356 = vmatpush.bf16.xpose.msra.mxu0 %v2337
        %2357 = vmatpush.bf16.xpose.msra.mxu0 %v2334
        %2358 = vmatpush.bf16.xpose.msra.mxu0 %v2331
        %2359 = vmatpush.bf16.xpose.msra.mxu0 %v2328
        %2360 = vmatpush.bf16.xpose.msra.mxu0 %v2325
        %2361 = vmatpush.bf16.xpose.msra.mxu0 %v2322
        %2362 = vmatpush.bf16.xpose.msra.mxu0 %v2319
        %2363 = vmatmul.bf16.gmra.mxu0 %v2292
        %v2364 = vpop.f32.mrf.mxu0
        %v2365 = vadd.f32 0.0, %v2364
        %v2366 = vpop.f32.mrf.mxu0
        %2367 = vdwg.mxu0
        %2368 = vst [vmem:[%s214] sm:$0xff] %v2352
        %2369 = vst [vmem:[%s214 + $0x8] sm:$0xff] %v2365
        %s2370 = sand.u32 %s131, 1
        %s2371 = scalar_lea.sflag [#allocation4], %s2370
        %s2372 = sand.u32 %s131, 1
        %s2373 = smul.addr %s2372, 16
        %s2374 = scalar_lea.vmem [#allocation3], %s2373
        // Predicated region
        $region37: #{tpu_custom_call.1} parent=35 // pred_check
          %p2375 = pneg %p141
        $region38: #{tpu_custom_call.1} parent=35 // pred_check_branch
          %2377 = sbr.rel (%p2375) target = $region40
        $region39: #{tpu_custom_call.1} parent=35 // pred_region
          %s2378 = smul.u32 2, %s23
          %2380 = vsyncadd %s2371, 0
          %s2381 = smul.addr %s22, 2
          %s2382 = sadd.s32 %s2378, %s2381
          %s2383 = smul.addr %s2382, 8
          %s2384 = scalar_lea.hbm %s4, %s2383
          %s2386 = sshll.u32 %s2374, 4
          %s2387 = int_to_ptr.vmem [resolvable:$true] %s2386
          %s2388 = sshll.u32 %s2384, 4
          %s2389 = int_to_ptr.hbm [resolvable:$true] %s2388
          %2391 = dma.vmem_to_hbm [thread:$0]  %s2387, 256, %s2389, %s2371
        $region40: #{tpu_custom_call.1} parent=35 // pred_fallthru
          _
      $region36: #{tpu_custom_call.1} parent=5 // pred_fallthru
        _
      %p2392 = scmp.le.s32.totalorder 2, %s13
      // Predicated region
      $region41: #{tpu_custom_call.1} parent=5 // pred_check
        %p2393 = pneg %p2392
      $region42: #{tpu_custom_call.1} parent=5 // pred_check_branch
        %2395 = sbr.rel (%p2393) target = $region44
      $region43: #{tpu_custom_call.1} parent=5 // pred_region
        %s2396 = ssub.s32 %s13, 2
        // Predicated region
        $region45: #{tpu_custom_call.1} parent=43 // pred_check
          %p2397 = pneg %p147
        $region46: #{tpu_custom_call.1} parent=43 // pred_check_branch
          %2399 = sbr.rel (%p2397) target = $region48
        $region47: #{tpu_custom_call.1} parent=43 // pred_region
          %s2400 = sand.u32 %s132, 1
          %s2401 = scalar_lea.sflag [#allocation4], %s2400
          %s2402 = sand.u32 %s132, 1
          %s2403 = smul.addr %s2402, 16
          %s2404 = scalar_lea.vmem [#allocation3], %s2403
          %2406 = dma.done %s2401, 256
        $region48: #{tpu_custom_call.1} parent=43 // pred_fallthru
          _
      $region44: #{tpu_custom_call.1} parent=5 // pred_fallthru
        _
    $region6: #{tpu_custom_call.1} parent=1 // loop_footer
      %s17 = sadd.s32 1, %s13
    $region7: #{tpu_custom_call.1} parent=1 // loop_footer_branch
      %12 = sbr.rel target = $region3
    $region8: #{tpu_custom_call.1} parent=1 // loop_exit
      _
    %2407 = vsyncpa [#allocation4], 1
    %s2408 = scalar_lea.sflag [#allocation4], 1
    %2409 = vsyncpa %s2408, 1

</llo_original>
